<compile_context>
chip_gen: v7x
topology: tpu7x:2x2x1
jax: 0.10.0
libtpu: 0.0.40
codegen_flags: <defaults>
</compile_context>

<pallas_src>
import functools

import jax
import jax.numpy as jnp
from jax import lax
from jax.experimental import pallas as pl
from jax.experimental.pallas import tpu as pltpu

THRESHOLD = 1.0
_LANE = 128
_SUBLANE = 8


def _round_up(n, m):
    return ((n + m - 1) // m) * m


def _bio_snn_kernel(x_ref, w1_ref, b1_ref, a1_ref, w2_ref, b2_ref, a2_ref,
                    trace1_out, memtr_out, spk2_out,
                    syn1, mem1, syn2, mem2,
                    cur1_buf, cur2_buf, spk2_buf, mem1row_buf,
                    *, inv_h, unroll):
    c = pl.program_id(0)

    # Zero-initialize the recurrent state on the first time chunk only.
    @pl.when(c == 0)
    def _():
        syn1[...] = jnp.zeros_like(syn1)
        mem1[...] = jnp.zeros_like(mem1)
        syn2[...] = jnp.zeros_like(syn2)
        mem2[...] = jnp.zeros_like(mem2)

    bp, hp = mem1.shape
    op = mem2.shape[1]
    tt = mem1row_buf.shape[0]          # time steps in this chunk
    thr = jnp.float32(THRESHOLD)

    # Loop-invariant broadcasts hoisted out of the recurrence (JAX does not
    # CSE broadcast_in_dim across unrolled iterations).
    a1 = jnp.broadcast_to(a1_ref[...], (bp, hp))
    a2 = jnp.broadcast_to(a2_ref[...], (bp, op))

    # ---- fc1 for the WHOLE time chunk: one MXU matmul, staged in VMEM. ----
    # x_ref is already flattened to (tt*bp, ip) by the wrapper.
    cur1_buf[...] = (jnp.dot(x_ref[...], w1_ref[...],
                             preferred_element_type=jnp.float32)
                     + b1_ref[...])

    # ---- pass 1: layer-1 Synaptic LIF recurrence (pure VPU). ----
    # After each step's current is consumed, the same rows of cur1_buf are
    # overwritten with spk1 (exact 0/1 in f32) so cur1_buf doubles as the
    # staging buffer for the batched fc2 matmul below.
    def step1(t, carry):
        row = pl.multiple_of(t * bp, bp)
        cur = cur1_buf[pl.ds(row, bp), :]                       # (bp, hp)
        reset = mem1[...] - thr > 0
        syn_new = a1 * syn1[...] + cur
        mem_new = a1 * mem1[...] + syn_new - jnp.where(reset, thr, 0.0)
        syn1[...] = syn_new
        mem1[...] = mem_new
        cur1_buf[pl.ds(row, bp), :] = (mem_new - thr > 0).astype(jnp.float32)
        mem1row_buf[pl.ds(t, 1), :] = mem_new[0:1, :]
        return carry

    lax.fori_loop(0, tt, step1, 0, unroll=unroll)

    # ---- fc2 for the WHOLE chunk on the staged spikes: one MXU matmul. ----
    spk1_flat = cur1_buf[...].astype(w2_ref.dtype)   # 0/1 -> lossless cast
    cur2_buf[...] = (jnp.dot(spk1_flat, w2_ref[...],
                             preferred_element_type=jnp.float32)
                     + b2_ref[...])

    # ---- pass 2: layer-2 Synaptic LIF recurrence (pure VPU). ----
    def step2(t, carry):
        row = pl.multiple_of(t * bp, bp)
        cur = cur2_buf[pl.ds(row, bp), :]                       # (bp, op)
        reset = mem2[...] - thr > 0
        syn_new = a2 * syn2[...] + cur
        mem_new = a2 * mem2[...] + syn_new - jnp.where(reset, thr, 0.0)
        syn2[...] = syn_new
        mem2[...] = mem_new
        spk2_buf[pl.ds(t, 1), :, :] = (
            (mem_new - thr > 0)[None, :, :].astype(jnp.float32))
        return carry

    lax.fori_loop(0, tt, step2, 0, unroll=unroll)

    # ---- post-loop: vectorized trace math + lane-dense full-block stores ----
    m_rows = mem1row_buf[...]                                   # (tt, hp)
    # trace1[t] = spk1[t][0] = (mem1_t[0] - thr > 0); spikes are 0/1 so bf16
    # storage is lossless.
    trace1_out[...] = (m_rows - thr > 0).astype(trace1_out.dtype)
    # mean over the real H columns; padded columns are exactly 0.
    m_mean = jnp.sum(m_rows, axis=1, keepdims=True) * inv_h
    memtr_out[...] = jnp.broadcast_to(m_mean, memtr_out.shape)
    spk2_out[...] = spk2_buf[...].astype(spk2_out.dtype)


def bio_snn_forward(x, w1, b1, alpha1, w2, b2, alpha2, *,
                    time_block=None, matmul_dtype=jnp.bfloat16):
    """x: (T, B, I).  Returns (trace1 (T,H), mem1_trace (T,), spk2_rec (T,B,O))."""
    T, B, I = x.shape
    H = w1.shape[1]
    O = w2.shape[1]
    f32 = jnp.float32
    mm_bytes = jnp.dtype(matmul_dtype).itemsize

    Bp = _round_up(B, _SUBLANE)
    Ip = _round_up(I, _LANE)
    Hp = _round_up(H, _LANE)
    Op = _round_up(O, _LANE)

    # --- VMEM footprint estimate (bytes) for a chunk of `tt` steps. ---------
    def vmem_estimate(tt):
        weights = 2 * mm_bytes * (Ip * Hp + Hp * Op)     # w1/w2 blocks (x2 buf)
        state = 2 * 4 * Bp * (Hp + Op)                   # syn/mem scratch
        vectors = 4 * 4 * (Hp + Op)                      # bias/alpha blocks
        per_step = (2 * mm_bytes * Bp * Ip               # x chunk (x2 buf)
                    + 4 * Bp * Hp                        # cur1_buf (=spk1 stage)
                    + 4 * Bp * Op + 4 * Bp * Op          # cur2_buf + spk2_buf
                    + 2 * 2 * Bp * Op                    # spk2 out block (bf16 x2)
                    + 2 * 2 * Hp + 2 * 4 * _LANE         # trace1/memtr out blocks
                    + 4 * Hp)                            # mem1row_buf
        return weights + state + vectors + tt * per_step

    # --- derive the time chunk from a conservative 48 MiB budget (v7x-safe) -
    if time_block is None:
        budget = 48 * 1024 * 1024
        tt = 16
        while tt < 128 and vmem_estimate(tt + 16) <= budget:
            tt += 16
        time_block = tt
    if time_block >= T:
        Tt = T                                    # single chunk: full extents
    else:
        # When chunked, Tt must be a multiple of 16 so the bf16 (Tt, Hp)
        # output block satisfies sublane tiling.
        Tt = max(16, (int(time_block) // 16) * 16)
    Tp = _round_up(T, Tt)
    n_chunks = Tp // Tt

    # Full unroll only when the per-step working set is small; partial unroll
    # bounds vreg pressure / compile time at MXU-scale shapes.
    step_vregs = (Bp * Hp + Bp * Op) // (_SUBLANE * _LANE)
    unroll = int(Tt) if step_vregs <= 32 else max(1, min(8, int(Tt)))

    vmem_limit = int(min(100 * 1024 * 1024,
                         max(32 * 1024 * 1024, int(1.25 * vmem_estimate(Tt)))))

    def pad2(a, r, c):
        a = jnp.asarray(a, f32)
        return jnp.pad(a, ((0, r - a.shape[0]), (0, c - a.shape[1])))

    xp = jnp.pad(jnp.asarray(x, f32),
                 ((0, Tp - T), (0, Bp - B), (0, Ip - I)))
    xp = xp.reshape(Tp * Bp, Ip).astype(matmul_dtype)   # flattened time-major
    w1p = pad2(w1, Ip, Hp).astype(matmul_dtype)
    b1p = pad2(jnp.reshape(b1, (1, H)), 1, Hp)
    a1p = pad2(jnp.reshape(alpha1, (1, H)), 1, Hp)
    w2p = pad2(w2, Hp, Op).astype(matmul_dtype)
    b2p = pad2(jnp.reshape(b2, (1, O)), 1, Op)
    a2p = pad2(jnp.reshape(alpha2, (1, O)), 1, Op)

    grid_spec = pltpu.PrefetchScalarGridSpec(
        num_scalar_prefetch=0,
        grid=(n_chunks,),
        in_specs=[
            pl.BlockSpec((Tt * Bp, Ip), lambda c: (c, 0)),   # x chunk (flat)
            pl.BlockSpec((Ip, Hp), lambda c: (0, 0)),        # w1
            pl.BlockSpec((1, Hp), lambda c: (0, 0)),         # b1
            pl.BlockSpec((1, Hp), lambda c: (0, 0)),         # alpha1 (=beta1)
            pl.BlockSpec((Hp, Op), lambda c: (0, 0)),        # w2
            pl.BlockSpec((1, Op), lambda c: (0, 0)),         # b2
            pl.BlockSpec((1, Op), lambda c: (0, 0)),         # alpha2 (=beta2)
        ],
        out_specs=[
            pl.BlockSpec((Tt, Hp), lambda c: (c, 0)),        # spk1[0] trace
            pl.BlockSpec((Tt, _LANE), lambda c: (c, 0)),     # mean(mem1[0])
            pl.BlockSpec((Tt, Bp, Op), lambda c: (c, 0, 0)), # spk2
        ],
        scratch_shapes=[
            pltpu.VMEM((Bp, Hp), f32),        # syn1
            pltpu.VMEM((Bp, Hp), f32),        # mem1
            pltpu.VMEM((Bp, Op), f32),        # syn2
            pltpu.VMEM((Bp, Op), f32),        # mem2
            pltpu.VMEM((Tt * Bp, Hp), f32),   # cur1_buf (fc1 cur -> spk1 stage)
            pltpu.VMEM((Tt * Bp, Op), f32),   # cur2_buf (batched fc2 output)
            pltpu.VMEM((Tt, Bp, Op), f32),    # spk2 staging
            pltpu.VMEM((Tt, Hp), f32),        # mem1[0] rows for trace math
        ],
    )

    flops = int(2 * Tp * Bp * (Ip * Hp + Hp * Op))
    bytes_accessed = int(
        mm_bytes * (xp.size + w1p.size + w2p.size)
        + 4 * (2 * Hp + 2 * Op + Tp * _LANE)
        + 2 * (Tp * Hp + Tp * Bp * Op))

    trace1_rec, memtr_rec, spk2_rec = pl.pallas_call(
        functools.partial(_bio_snn_kernel, inv_h=1.0 / H, unroll=unroll),
        out_shape=(
            jax.ShapeDtypeStruct((Tp, Hp), jnp.bfloat16),    # spikes are 0/1
            jax.ShapeDtypeStruct((Tp, _LANE), f32),
            jax.ShapeDtypeStruct((Tp, Bp, Op), jnp.bfloat16),
        ),
        grid_spec=grid_spec,
        compiler_params=pltpu.CompilerParams(
            # recurrent state carried across time chunks -> sequential axis
            dimension_semantics=("arbitrary",),
            vmem_limit_bytes=vmem_limit,
        ),
        cost_estimate=pl.CostEstimate(flops=flops, transcendentals=0,
                                      bytes_accessed=bytes_accessed),
    )(xp, w1p, b1p, a1p, w2p, b2p, a2p)

    # Glue matching the PyTorch return values.
    trace1 = trace1_rec[:T, :H].astype(f32)
    mem1_trace = memtr_rec[:T, 0]
    spk2 = spk2_rec[:T, :B, :O].astype(f32)
    return trace1, mem1_trace, spk2


def _reference_forward(x, w1, b1, alpha1, w2, b2, alpha2,
                       matmul_dtype=jnp.float32):
    """Pure-JAX reference with identical semantics (for correctness check)."""
    T, B, I = x.shape
    H = w1.shape[1]
    O = w2.shape[1]

    def mm(a, b):
        return jnp.dot(a.astype(matmul_dtype), b.astype(matmul_dtype),
                       preferred_element_type=jnp.float32)

    syn1 = jnp.zeros((B, H)); mem1 = jnp.zeros((B, H))
    syn2 = jnp.zeros((B, O)); mem2 = jnp.zeros((B, O))
    spk1s, mem1s, spk2s = [], [], []
    for t in range(T):
        cur1 = mm(x[t], w1) + b1
        r1 = (mem1 - THRESHOLD > 0).astype(jnp.float32)
        syn1 = alpha1 * syn1 + cur1
        mem1 = alpha1 * mem1 + syn1 - r1 * THRESHOLD
        spk1 = (mem1 - THRESHOLD > 0).astype(jnp.float32)
        cur2 = mm(spk1, w2) + b2
        r2 = (mem2 - THRESHOLD > 0).astype(jnp.float32)
        syn2 = alpha2 * syn2 + cur2
        mem2 = alpha2 * mem2 + syn2 - r2 * THRESHOLD
        spk2 = (mem2 - THRESHOLD > 0).astype(jnp.float32)
        spk1s.append(spk1); mem1s.append(mem1); spk2s.append(spk2)
    spk1_rec = jnp.stack(spk1s); mem1_rec = jnp.stack(mem1s); spk2_rec = jnp.stack(spk2s)
    return spk1_rec[:, 0, :], mem1_rec[:, 0, :].mean(axis=-1), spk2_rec


if __name__ == "__main__":
    # Small, MNIST-shaped-in-spirit problem.
    num_steps = 8
    B = 2
    num_inputs = 32
    num_hidden = 32
    num_outputs = 16
    tau_min, tau_max = 2.0, 5.0

    key = jax.random.PRNGKey(0)
    kx, kw1, kb1, kw2, kb2 = jax.random.split(key, 5)

    # Deterministic synthetic parameter init (not a checkpoint load).
    w1 = (jax.random.normal(kw1, (num_inputs, num_hidden), jnp.float32)
          / jnp.sqrt(num_inputs))                      # fc1.weight.T
    b1 = jax.random.normal(kb1, (1, num_hidden), jnp.float32) * 0.1
    w2 = (jax.random.normal(kw2, (num_hidden, num_outputs), jnp.float32)
          / jnp.sqrt(num_hidden))                      # fc2.weight.T
    b2 = jax.random.normal(kb2, (1, num_outputs), jnp.float32) * 0.1

    taus1 = jnp.linspace(tau_min, tau_max, num_hidden, dtype=jnp.float32)
    alpha1 = jnp.exp(-1.0 / taus1)[None, :]            # beta1 == alpha1
    taus2 = jnp.linspace(tau_min, tau_max, num_outputs, dtype=jnp.float32)
    alpha2 = jnp.exp(-1.0 / taus2)[None, :]            # beta2 == alpha2

    # Input currents: (T, B, num_inputs)
    x = jax.random.uniform(kx, (num_steps, B, num_inputs), jnp.float32) * 2.0

    # --- f32 MXU path: bit-faithful check against the pure-JAX reference. ---
    trace1, mem1_trace, spk2_rec = bio_snn_forward(
        x, w1, b1, alpha1, w2, b2, alpha2, matmul_dtype=jnp.float32)
    jax.block_until_ready((trace1, mem1_trace, spk2_rec))

    r_trace1, r_mem1_trace, r_spk2 = _reference_forward(
        x, w1, b1, alpha1, w2, b2, alpha2, matmul_dtype=jnp.float32)
    assert trace1.shape == (num_steps, num_hidden)
    assert mem1_trace.shape == (num_steps,)
    assert spk2_rec.shape == (num_steps, B, num_outputs)
    assert jnp.allclose(trace1, r_trace1, atol=1e-6)
    assert jnp.allclose(mem1_trace, r_mem1_trace, atol=1e-5)
    assert jnp.allclose(spk2_rec, r_spk2, atol=1e-6)

    # --- bf16 MXU path (performance default): loose agreement smoke check. ---
    t1b, mtb, s2b = bio_snn_forward(x, w1, b1, alpha1, w2, b2, alpha2)
    jax.block_until_ready((t1b, mtb, s2b))
    rb_t1, rb_mt, rb_s2 = _reference_forward(
        x, w1, b1, alpha1, w2, b2, alpha2, matmul_dtype=jnp.bfloat16)
    assert t1b.shape == (num_steps, num_hidden)
    assert mtb.shape == (num_steps,)
    assert s2b.shape == (num_steps, B, num_outputs)
    assert bool(jnp.all((t1b == 0.0) | (t1b == 1.0)))
    assert bool(jnp.all((s2b == 0.0) | (s2b == 1.0)))
    assert float(jnp.mean((t1b == rb_t1).astype(jnp.float32))) >= 0.95
    assert float(jnp.mean((s2b == rb_s2).astype(jnp.float32))) >= 0.95
    assert float(jnp.max(jnp.abs(mtb - rb_mt))) < 0.1

    print("KERNEL_OK")
</pallas_src>

<mosaic_0001>
module attributes {stable_mosaic.version = 11 : i64} {
  func.func @_bio_snn_kernel(%arg0: i32, %arg1: memref<64x128xf32, #tpu.memory_space<vmem>>, %arg2: memref<128x128xf32, #tpu.memory_space<vmem>>, %arg3: memref<1x128xf32, #tpu.memory_space<vmem>>, %arg4: memref<1x128xf32, #tpu.memory_space<vmem>>, %arg5: memref<128x128xf32, #tpu.memory_space<vmem>>, %arg6: memref<1x128xf32, #tpu.memory_space<vmem>>, %arg7: memref<1x128xf32, #tpu.memory_space<vmem>>, %arg8: memref<8x128xbf16, #tpu.memory_space<vmem>>, %arg9: memref<8x128xf32, #tpu.memory_space<vmem>>, %arg10: memref<8x8x128xbf16, #tpu.memory_space<vmem>>, %arg11: memref<8x128xf32, #tpu.memory_space<vmem>>, %arg12: memref<8x128xf32, #tpu.memory_space<vmem>>, %arg13: memref<8x128xf32, #tpu.memory_space<vmem>>, %arg14: memref<8x128xf32, #tpu.memory_space<vmem>>, %arg15: memref<64x128xf32, #tpu.memory_space<vmem>>, %arg16: memref<64x128xf32, #tpu.memory_space<vmem>>, %arg17: memref<8x8x128xf32, #tpu.memory_space<vmem>>, %arg18: memref<8x128xf32, #tpu.memory_space<vmem>>) attributes {dimension_semantics = [#tpu.dimension_semantics<arbitrary>], iteration_bounds = array<i64: 1>, scalar_prefetch = 0 : i64, scratch_operands = 8 : i64, tpu.core_type = #tpu.core_type<tc>, window_params = [{transform_indices = @transform_0, window_bounds = array<i64: 64, 128>}, {pipeline_mode = #tpu.pipeline_mode<synchronous>, transform_indices = @transform_1, window_bounds = array<i64: 128, 128>}, {pipeline_mode = #tpu.pipeline_mode<synchronous>, transform_indices = @transform_2, window_bounds = array<i64: 1, 128>}, {pipeline_mode = #tpu.pipeline_mode<synchronous>, transform_indices = @transform_3, window_bounds = array<i64: 1, 128>}, {pipeline_mode = #tpu.pipeline_mode<synchronous>, transform_indices = @transform_4, window_bounds = array<i64: 128, 128>}, {pipeline_mode = #tpu.pipeline_mode<synchronous>, transform_indices = @transform_5, window_bounds = array<i64: 1, 128>}, {pipeline_mode = #tpu.pipeline_mode<synchronous>, transform_indices = @transform_6, window_bounds = array<i64: 1, 128>}, {transform_indices = @transform_7, window_bounds = array<i64: 8, 128>}, {transform_indices = @transform_8, window_bounds = array<i64: 8, 128>}, {transform_indices = @transform_9, window_bounds = array<i64: 8, 8, 128>}]} {
    %c0_i32 = arith.constant 0 : i32
    %0 = arith.cmpi eq, %arg0, %c0_i32 : i32
    %1 = arith.extui %0 : i1 to i32
    %c0_i32_0 = arith.constant 0 : i32
    %2 = arith.cmpi ne, %1, %c0_i32_0 : i32
    scf.if %2 {
      %cst_321 = arith.constant 0.000000e+00 : f32
      %538 = vector.broadcast %cst_321 : f32 to vector<8x128xf32>
      %c0_322 = arith.constant 0 : index
      %c0_323 = arith.constant 0 : index
      %539 = vector.load %arg11[%c0_322, %c0_323] : memref<8x128xf32, #tpu.memory_space<vmem>>, vector<8x128xf32>
      tpu.vector_store %arg11[%c0_322, %c0_323], %538 {strides = array<i32>} : memref<8x128xf32, #tpu.memory_space<vmem>>, vector<8x128xf32>,
      %cst_324 = arith.constant 0.000000e+00 : f32
      %540 = vector.broadcast %cst_324 : f32 to vector<8x128xf32>
      %c0_325 = arith.constant 0 : index
      %c0_326 = arith.constant 0 : index
      %541 = vector.load %arg12[%c0_325, %c0_326] : memref<8x128xf32, #tpu.memory_space<vmem>>, vector<8x128xf32>
      tpu.vector_store %arg12[%c0_325, %c0_326], %540 {strides = array<i32>} : memref<8x128xf32, #tpu.memory_space<vmem>>, vector<8x128xf32>,
      %cst_327 = arith.constant 0.000000e+00 : f32
      %542 = vector.broadcast %cst_327 : f32 to vector<8x128xf32>
      %c0_328 = arith.constant 0 : index
      %c0_329 = arith.constant 0 : index
      %543 = vector.load %arg13[%c0_328, %c0_329] : memref<8x128xf32, #tpu.memory_space<vmem>>, vector<8x128xf32>
      tpu.vector_store %arg13[%c0_328, %c0_329], %542 {strides = array<i32>} : memref<8x128xf32, #tpu.memory_space<vmem>>, vector<8x128xf32>,
      %cst_330 = arith.constant 0.000000e+00 : f32
      %544 = vector.broadcast %cst_330 : f32 to vector<8x128xf32>
      %c0_331 = arith.constant 0 : index
      %c0_332 = arith.constant 0 : index
      %545 = vector.load %arg14[%c0_331, %c0_332] : memref<8x128xf32, #tpu.memory_space<vmem>>, vector<8x128xf32>
      tpu.vector_store %arg14[%c0_331, %c0_332], %544 {strides = array<i32>} : memref<8x128xf32, #tpu.memory_space<vmem>>, vector<8x128xf32>,
    } else {
    }
    %c0 = arith.constant 0 : index
    %c0_1 = arith.constant 0 : index
    %3 = vector.load %arg4[%c0, %c0_1] : memref<1x128xf32, #tpu.memory_space<vmem>>, vector<1x128xf32>
    %4 = vector.shape_cast %3 : vector<1x128xf32> to vector<1x128xf32>
    %5 = vector.broadcast %4 : vector<1x128xf32> to vector<8x128xf32>
    %c0_2 = arith.constant 0 : index
    %c0_3 = arith.constant 0 : index
    %6 = vector.load %arg7[%c0_2, %c0_3] : memref<1x128xf32, #tpu.memory_space<vmem>>, vector<1x128xf32>
    %7 = vector.shape_cast %6 : vector<1x128xf32> to vector<1x128xf32>
    %8 = vector.broadcast %7 : vector<1x128xf32> to vector<8x128xf32>
    %c0_4 = arith.constant 0 : index
    %c0_5 = arith.constant 0 : index
    %9 = vector.load %arg1[%c0_4, %c0_5] : memref<64x128xf32, #tpu.memory_space<vmem>>, vector<64x128xf32>
    %c0_6 = arith.constant 0 : index
    %c0_7 = arith.constant 0 : index
    %10 = vector.load %arg2[%c0_6, %c0_7] : memref<128x128xf32, #tpu.memory_space<vmem>>, vector<128x128xf32>
    %cst = arith.constant dense<0.000000e+00> : vector<64x128xf32>
    %11 = tpu.matmul %9, %10, %cst {dimension_numbers = #tpu.dot_dimension_numbers<[1], [0], [0], [1], [0, 0, 1, 1], [], []>} : vector<64x128xf32>, vector<128x128xf32>, vector<64x128xf32> -> vector<64x128xf32>
    %c0_8 = arith.constant 0 : index
    %c0_9 = arith.constant 0 : index
    %12 = vector.load %arg3[%c0_8, %c0_9] : memref<1x128xf32, #tpu.memory_space<vmem>>, vector<1x128xf32>
    %13 = vector.broadcast %12 : vector<1x128xf32> to vector<64x128xf32>
    %14 = arith.addf %11, %13 : vector<64x128xf32>
    %c0_10 = arith.constant 0 : index
    %c0_11 = arith.constant 0 : index
    %15 = vector.load %arg15[%c0_10, %c0_11] : memref<64x128xf32, #tpu.memory_space<vmem>>, vector<64x128xf32>
    tpu.vector_store %arg15[%c0_10, %c0_11], %14 {strides = array<i32>} : memref<64x128xf32, #tpu.memory_space<vmem>>, vector<64x128xf32>,
    %cst_12 = arith.constant 1.000000e+00 : f32
    %c0_i32_13 = arith.constant 0 : i32
    %c8_i32 = arith.constant 8 : i32
    %16 = arith.muli %c0_i32_13, %c8_i32 : i32
    %17 = tpu.assume_multiple %16, 8 : i32
    %18 = arith.index_cast %17 : i32 to index
    %c0_14 = arith.constant 0 : index
    %19 = vector.load %arg15[%18, %c0_14] : memref<64x128xf32, #tpu.memory_space<vmem>>, vector<8x128xf32>
    %c0_15 = arith.constant 0 : index
    %c0_16 = arith.constant 0 : index
    %20 = vector.load %arg12[%c0_15, %c0_16] : memref<8x128xf32, #tpu.memory_space<vmem>>, vector<8x128xf32>
    %21 = vector.broadcast %cst_12 : f32 to vector<8x128xf32>
    %22 = arith.subf %20, %21 : vector<8x128xf32>
    %cst_17 = arith.constant 0.000000e+00 : f32
    %23 = vector.broadcast %cst_17 : f32 to vector<8x128xf32>
    %24 = arith.cmpf ogt, %22, %23 : vector<8x128xf32>
    %c0_18 = arith.constant 0 : index
    %c0_19 = arith.constant 0 : index
    %25 = vector.load %arg11[%c0_18, %c0_19] : memref<8x128xf32, #tpu.memory_space<vmem>>, vector<8x128xf32>
    %26 = arith.mulf %5, %25 : vector<8x128xf32>
    %27 = arith.addf %26, %19 : vector<8x128xf32>
    %c0_20 = arith.constant 0 : index
    %c0_21 = arith.constant 0 : index
    %28 = vector.load %arg12[%c0_20, %c0_21] : memref<8x128xf32, #tpu.memory_space<vmem>>, vector<8x128xf32>
    %29 = arith.mulf %5, %28 : vector<8x128xf32>
    %30 = arith.addf %29, %27 : vector<8x128xf32>
    %cst_22 = arith.constant 0.000000e+00 : f32
    %31 = vector.broadcast %cst_12 : f32 to vector<8x128xf32>
    %32 = vector.broadcast %cst_22 : f32 to vector<8x128xf32>
    %33 = arith.select %24, %31, %32 : vector<8x128xi1>, vector<8x128xf32>
    %34 = arith.subf %30, %33 : vector<8x128xf32>
    %c0_23 = arith.constant 0 : index
    %c0_24 = arith.constant 0 : index
    %35 = vector.load %arg11[%c0_23, %c0_24] : memref<8x128xf32, #tpu.memory_space<vmem>>, vector<8x128xf32>
    tpu.vector_store %arg11[%c0_23, %c0_24], %27 {strides = array<i32>} : memref<8x128xf32, #tpu.memory_space<vmem>>, vector<8x128xf32>,
    %c0_25 = arith.constant 0 : index
    %c0_26 = arith.constant 0 : index
    %36 = vector.load %arg12[%c0_25, %c0_26] : memref<8x128xf32, #tpu.memory_space<vmem>>, vector<8x128xf32>
    tpu.vector_store %arg12[%c0_25, %c0_26], %34 {strides = array<i32>} : memref<8x128xf32, #tpu.memory_space<vmem>>, vector<8x128xf32>,
    %37 = vector.broadcast %cst_12 : f32 to vector<8x128xf32>
    %38 = arith.subf %34, %37 : vector<8x128xf32>
    %cst_27 = arith.constant 0.000000e+00 : f32
    %39 = vector.broadcast %cst_27 : f32 to vector<8x128xf32>
    %40 = arith.cmpf ogt, %38, %39 : vector<8x128xf32>
    %41 = arith.extui %40 : vector<8x128xi1> to vector<8x128xi32>
    %42 = arith.sitofp %41 : vector<8x128xi32> to vector<8x128xf32>
    %43 = arith.index_cast %17 : i32 to index
    %c0_28 = arith.constant 0 : index
    %44 = vector.load %arg15[%43, %c0_28] : memref<64x128xf32, #tpu.memory_space<vmem>>, vector<8x128xf32>
    tpu.vector_store %arg15[%43, %c0_28], %42 {strides = array<i32>} : memref<64x128xf32, #tpu.memory_space<vmem>>, vector<8x128xf32>,
    %45 = vector.extract_strided_slice %34 {offsets = [0, 0], sizes = [1, 128], strides = [1, 1]} : vector<8x128xf32> to vector<1x128xf32>
    %46 = arith.index_cast %c0_i32_13 : i32 to index
    %c0_29 = arith.constant 0 : index
    %47 = vector.load %arg18[%46, %c0_29] : memref<8x128xf32, #tpu.memory_space<vmem>>, vector<1x128xf32>
    tpu.vector_store %arg18[%46, %c0_29], %45 {strides = array<i32>} : memref<8x128xf32, #tpu.memory_space<vmem>>, vector<1x128xf32>,
    %c1_i32 = arith.constant 1 : i32
    %c8_i32_30 = arith.constant 8 : i32
    %48 = arith.muli %c1_i32, %c8_i32_30 : i32
    %49 = tpu.assume_multiple %48, 8 : i32
    %50 = arith.index_cast %49 : i32 to index
    %c0_31 = arith.constant 0 : index
    %51 = vector.load %arg15[%50, %c0_31] : memref<64x128xf32, #tpu.memory_space<vmem>>, vector<8x128xf32>
    %c0_32 = arith.constant 0 : index
    %c0_33 = arith.constant 0 : index
    %52 = vector.load %arg12[%c0_32, %c0_33] : memref<8x128xf32, #tpu.memory_space<vmem>>, vector<8x128xf32>
    %53 = vector.broadcast %cst_12 : f32 to vector<8x128xf32>
    %54 = arith.subf %52, %53 : vector<8x128xf32>
    %cst_34 = arith.constant 0.000000e+00 : f32
    %55 = vector.broadcast %cst_34 : f32 to vector<8x128xf32>
    %56 = arith.cmpf ogt, %54, %55 : vector<8x128xf32>
    %c0_35 = arith.constant 0 : index
    %c0_36 = arith.constant 0 : index
    %57 = vector.load %arg11[%c0_35, %c0_36] : memref<8x128xf32, #tpu.memory_space<vmem>>, vector<8x128xf32>
    %58 = arith.mulf %5, %57 : vector<8x128xf32>
    %59 = arith.addf %58, %51 : vector<8x128xf32>
    %c0_37 = arith.constant 0 : index
    %c0_38 = arith.constant 0 : index
    %60 = vector.load %arg12[%c0_37, %c0_38] : memref<8x128xf32, #tpu.memory_space<vmem>>, vector<8x128xf32>
    %61 = arith.mulf %5, %60 : vector<8x128xf32>
    %62 = arith.addf %61, %59 : vector<8x128xf32>
    %cst_39 = arith.constant 0.000000e+00 : f32
    %63 = vector.broadcast %cst_12 : f32 to vector<8x128xf32>
    %64 = vector.broadcast %cst_39 : f32 to vector<8x128xf32>
    %65 = arith.select %56, %63, %64 : vector<8x128xi1>, vector<8x128xf32>
    %66 = arith.subf %62, %65 : vector<8x128xf32>
    %c0_40 = arith.constant 0 : index
    %c0_41 = arith.constant 0 : index
    %67 = vector.load %arg11[%c0_40, %c0_41] : memref<8x128xf32, #tpu.memory_space<vmem>>, vector<8x128xf32>
    tpu.vector_store %arg11[%c0_40, %c0_41], %59 {strides = array<i32>} : memref<8x128xf32, #tpu.memory_space<vmem>>, vector<8x128xf32>,
    %c0_42 = arith.constant 0 : index
    %c0_43 = arith.constant 0 : index
    %68 = vector.load %arg12[%c0_42, %c0_43] : memref<8x128xf32, #tpu.memory_space<vmem>>, vector<8x128xf32>
    tpu.vector_store %arg12[%c0_42, %c0_43], %66 {strides = array<i32>} : memref<8x128xf32, #tpu.memory_space<vmem>>, vector<8x128xf32>,
    %69 = vector.broadcast %cst_12 : f32 to vector<8x128xf32>
    %70 = arith.subf %66, %69 : vector<8x128xf32>
    %cst_44 = arith.constant 0.000000e+00 : f32
    %71 = vector.broadcast %cst_44 : f32 to vector<8x128xf32>
    %72 = arith.cmpf ogt, %70, %71 : vector<8x128xf32>
    %73 = arith.extui %72 : vector<8x128xi1> to vector<8x128xi32>
    %74 = arith.sitofp %73 : vector<8x128xi32> to vector<8x128xf32>
    %75 = arith.index_cast %49 : i32 to index
    %c0_45 = arith.constant 0 : index
    %76 = vector.load %arg15[%75, %c0_45] : memref<64x128xf32, #tpu.memory_space<vmem>>, vector<8x128xf32>
    tpu.vector_store %arg15[%75, %c0_45], %74 {strides = array<i32>} : memref<64x128xf32, #tpu.memory_space<vmem>>, vector<8x128xf32>,
    %77 = vector.extract_strided_slice %66 {offsets = [0, 0], sizes = [1, 128], strides = [1, 1]} : vector<8x128xf32> to vector<1x128xf32>
    %78 = arith.index_cast %c1_i32 : i32 to index
    %c0_46 = arith.constant 0 : index
    %79 = vector.load %arg18[%78, %c0_46] : memref<8x128xf32, #tpu.memory_space<vmem>>, vector<1x128xf32>
    tpu.vector_store %arg18[%78, %c0_46], %77 {strides = array<i32>} : memref<8x128xf32, #tpu.memory_space<vmem>>, vector<1x128xf32>,
    %c2_i32 = arith.constant 2 : i32
    %c8_i32_47 = arith.constant 8 : i32
    %80 = arith.muli %c2_i32, %c8_i32_47 : i32
    %81 = tpu.assume_multiple %80, 8 : i32
    %82 = arith.index_cast %81 : i32 to index
    %c0_48 = arith.constant 0 : index
    %83 = vector.load %arg15[%82, %c0_48] : memref<64x128xf32, #tpu.memory_space<vmem>>, vector<8x128xf32>
    %c0_49 = arith.constant 0 : index
    %c0_50 = arith.constant 0 : index
    %84 = vector.load %arg12[%c0_49, %c0_50] : memref<8x128xf32, #tpu.memory_space<vmem>>, vector<8x128xf32>
    %85 = vector.broadcast %cst_12 : f32 to vector<8x128xf32>
    %86 = arith.subf %84, %85 : vector<8x128xf32>
    %cst_51 = arith.constant 0.000000e+00 : f32
    %87 = vector.broadcast %cst_51 : f32 to vector<8x128xf32>
    %88 = arith.cmpf ogt, %86, %87 : vector<8x128xf32>
    %c0_52 = arith.constant 0 : index
    %c0_53 = arith.constant 0 : index
    %89 = vector.load %arg11[%c0_52, %c0_53] : memref<8x128xf32, #tpu.memory_space<vmem>>, vector<8x128xf32>
    %90 = arith.mulf %5, %89 : vector<8x128xf32>
    %91 = arith.addf %90, %83 : vector<8x128xf32>
    %c0_54 = arith.constant 0 : index
    %c0_55 = arith.constant 0 : index
    %92 = vector.load %arg12[%c0_54, %c0_55] : memref<8x128xf32, #tpu.memory_space<vmem>>, vector<8x128xf32>
    %93 = arith.mulf %5, %92 : vector<8x128xf32>
    %94 = arith.addf %93, %91 : vector<8x128xf32>
    %cst_56 = arith.constant 0.000000e+00 : f32
    %95 = vector.broadcast %cst_12 : f32 to vector<8x128xf32>
    %96 = vector.broadcast %cst_56 : f32 to vector<8x128xf32>
    %97 = arith.select %88, %95, %96 : vector<8x128xi1>, vector<8x128xf32>
    %98 = arith.subf %94, %97 : vector<8x128xf32>
    %c0_57 = arith.constant 0 : index
    %c0_58 = arith.constant 0 : index
    %99 = vector.load %arg11[%c0_57, %c0_58] : memref<8x128xf32, #tpu.memory_space<vmem>>, vector<8x128xf32>
    tpu.vector_store %arg11[%c0_57, %c0_58], %91 {strides = array<i32>} : memref<8x128xf32, #tpu.memory_space<vmem>>, vector<8x128xf32>,
    %c0_59 = arith.constant 0 : index
    %c0_60 = arith.constant 0 : index
    %100 = vector.load %arg12[%c0_59, %c0_60] : memref<8x128xf32, #tpu.memory_space<vmem>>, vector<8x128xf32>
    tpu.vector_store %arg12[%c0_59, %c0_60], %98 {strides = array<i32>} : memref<8x128xf32, #tpu.memory_space<vmem>>, vector<8x128xf32>,
    %101 = vector.broadcast %cst_12 : f32 to vector<8x128xf32>
    %102 = arith.subf %98, %101 : vector<8x128xf32>
    %cst_61 = arith.constant 0.000000e+00 : f32
    %103 = vector.broadcast %cst_61 : f32 to vector<8x128xf32>
    %104 = arith.cmpf ogt, %102, %103 : vector<8x128xf32>
    %105 = arith.extui %104 : vector<8x128xi1> to vector<8x128xi32>
    %106 = arith.sitofp %105 : vector<8x128xi32> to vector<8x128xf32>
    %107 = arith.index_cast %81 : i32 to index
    %c0_62 = arith.constant 0 : index
    %108 = vector.load %arg15[%107, %c0_62] : memref<64x128xf32, #tpu.memory_space<vmem>>, vector<8x128xf32>
    tpu.vector_store %arg15[%107, %c0_62], %106 {strides = array<i32>} : memref<64x128xf32, #tpu.memory_space<vmem>>, vector<8x128xf32>,
    %109 = vector.extract_strided_slice %98 {offsets = [0, 0], sizes = [1, 128], strides = [1, 1]} : vector<8x128xf32> to vector<1x128xf32>
    %110 = arith.index_cast %c2_i32 : i32 to index
    %c0_63 = arith.constant 0 : index
    %111 = vector.load %arg18[%110, %c0_63] : memref<8x128xf32, #tpu.memory_space<vmem>>, vector<1x128xf32>
    tpu.vector_store %arg18[%110, %c0_63], %109 {strides = array<i32>} : memref<8x128xf32, #tpu.memory_space<vmem>>, vector<1x128xf32>,
    %c3_i32 = arith.constant 3 : i32
    %c8_i32_64 = arith.constant 8 : i32
    %112 = arith.muli %c3_i32, %c8_i32_64 : i32
    %113 = tpu.assume_multiple %112, 8 : i32
    %114 = arith.index_cast %113 : i32 to index
    %c0_65 = arith.constant 0 : index
    %115 = vector.load %arg15[%114, %c0_65] : memref<64x128xf32, #tpu.memory_space<vmem>>, vector<8x128xf32>
    %c0_66 = arith.constant 0 : index
    %c0_67 = arith.constant 0 : index
    %116 = vector.load %arg12[%c0_66, %c0_67] : memref<8x128xf32, #tpu.memory_space<vmem>>, vector<8x128xf32>
    %117 = vector.broadcast %cst_12 : f32 to vector<8x128xf32>
    %118 = arith.subf %116, %117 : vector<8x128xf32>
    %cst_68 = arith.constant 0.000000e+00 : f32
    %119 = vector.broadcast %cst_68 : f32 to vector<8x128xf32>
    %120 = arith.cmpf ogt, %118, %119 : vector<8x128xf32>
    %c0_69 = arith.constant 0 : index
    %c0_70 = arith.constant 0 : index
    %121 = vector.load %arg11[%c0_69, %c0_70] : memref<8x128xf32, #tpu.memory_space<vmem>>, vector<8x128xf32>
    %122 = arith.mulf %5, %121 : vector<8x128xf32>
    %123 = arith.addf %122, %115 : vector<8x128xf32>
    %c0_71 = arith.constant 0 : index
    %c0_72 = arith.constant 0 : index
    %124 = vector.load %arg12[%c0_71, %c0_72] : memref<8x128xf32, #tpu.memory_space<vmem>>, vector<8x128xf32>
    %125 = arith.mulf %5, %124 : vector<8x128xf32>
    %126 = arith.addf %125, %123 : vector<8x128xf32>
    %cst_73 = arith.constant 0.000000e+00 : f32
    %127 = vector.broadcast %cst_12 : f32 to vector<8x128xf32>
    %128 = vector.broadcast %cst_73 : f32 to vector<8x128xf32>
    %129 = arith.select %120, %127, %128 : vector<8x128xi1>, vector<8x128xf32>
    %130 = arith.subf %126, %129 : vector<8x128xf32>
    %c0_74 = arith.constant 0 : index
    %c0_75 = arith.constant 0 : index
    %131 = vector.load %arg11[%c0_74, %c0_75] : memref<8x128xf32, #tpu.memory_space<vmem>>, vector<8x128xf32>
    tpu.vector_store %arg11[%c0_74, %c0_75], %123 {strides = array<i32>} : memref<8x128xf32, #tpu.memory_space<vmem>>, vector<8x128xf32>,
    %c0_76 = arith.constant 0 : index
    %c0_77 = arith.constant 0 : index
    %132 = vector.load %arg12[%c0_76, %c0_77] : memref<8x128xf32, #tpu.memory_space<vmem>>, vector<8x128xf32>
    tpu.vector_store %arg12[%c0_76, %c0_77], %130 {strides = array<i32>} : memref<8x128xf32, #tpu.memory_space<vmem>>, vector<8x128xf32>,
    %133 = vector.broadcast %cst_12 : f32 to vector<8x128xf32>
    %134 = arith.subf %130, %133 : vector<8x128xf32>
    %cst_78 = arith.constant 0.000000e+00 : f32
    %135 = vector.broadcast %cst_78 : f32 to vector<8x128xf32>
    %136 = arith.cmpf ogt, %134, %135 : vector<8x128xf32>
    %137 = arith.extui %136 : vector<8x128xi1> to vector<8x128xi32>
    %138 = arith.sitofp %137 : vector<8x128xi32> to vector<8x128xf32>
    %139 = arith.index_cast %113 : i32 to index
    %c0_79 = arith.constant 0 : index
    %140 = vector.load %arg15[%139, %c0_79] : memref<64x128xf32, #tpu.memory_space<vmem>>, vector<8x128xf32>
    tpu.vector_store %arg15[%139, %c0_79], %138 {strides = array<i32>} : memref<64x128xf32, #tpu.memory_space<vmem>>, vector<8x128xf32>,
    %141 = vector.extract_strided_slice %130 {offsets = [0, 0], sizes = [1, 128], strides = [1, 1]} : vector<8x128xf32> to vector<1x128xf32>
    %142 = arith.index_cast %c3_i32 : i32 to index
    %c0_80 = arith.constant 0 : index
    %143 = vector.load %arg18[%142, %c0_80] : memref<8x128xf32, #tpu.memory_space<vmem>>, vector<1x128xf32>
    tpu.vector_store %arg18[%142, %c0_80], %141 {strides = array<i32>} : memref<8x128xf32, #tpu.memory_space<vmem>>, vector<1x128xf32>,
    %c4_i32 = arith.constant 4 : i32
    %c8_i32_81 = arith.constant 8 : i32
    %144 = arith.muli %c4_i32, %c8_i32_81 : i32
    %145 = tpu.assume_multiple %144, 8 : i32
    %146 = arith.index_cast %145 : i32 to index
    %c0_82 = arith.constant 0 : index
    %147 = vector.load %arg15[%146, %c0_82] : memref<64x128xf32, #tpu.memory_space<vmem>>, vector<8x128xf32>
    %c0_83 = arith.constant 0 : index
    %c0_84 = arith.constant 0 : index
    %148 = vector.load %arg12[%c0_83, %c0_84] : memref<8x128xf32, #tpu.memory_space<vmem>>, vector<8x128xf32>
    %149 = vector.broadcast %cst_12 : f32 to vector<8x128xf32>
    %150 = arith.subf %148, %149 : vector<8x128xf32>
    %cst_85 = arith.constant 0.000000e+00 : f32
    %151 = vector.broadcast %cst_85 : f32 to vector<8x128xf32>
    %152 = arith.cmpf ogt, %150, %151 : vector<8x128xf32>
    %c0_86 = arith.constant 0 : index
    %c0_87 = arith.constant 0 : index
    %153 = vector.load %arg11[%c0_86, %c0_87] : memref<8x128xf32, #tpu.memory_space<vmem>>, vector<8x128xf32>
    %154 = arith.mulf %5, %153 : vector<8x128xf32>
    %155 = arith.addf %154, %147 : vector<8x128xf32>
    %c0_88 = arith.constant 0 : index
    %c0_89 = arith.constant 0 : index
    %156 = vector.load %arg12[%c0_88, %c0_89] : memref<8x128xf32, #tpu.memory_space<vmem>>, vector<8x128xf32>
    %157 = arith.mulf %5, %156 : vector<8x128xf32>
    %158 = arith.addf %157, %155 : vector<8x128xf32>
    %cst_90 = arith.constant 0.000000e+00 : f32
    %159 = vector.broadcast %cst_12 : f32 to vector<8x128xf32>
    %160 = vector.broadcast %cst_90 : f32 to vector<8x128xf32>
    %161 = arith.select %152, %159, %160 : vector<8x128xi1>, vector<8x128xf32>
    %162 = arith.subf %158, %161 : vector<8x128xf32>
    %c0_91 = arith.constant 0 : index
    %c0_92 = arith.constant 0 : index
    %163 = vector.load %arg11[%c0_91, %c0_92] : memref<8x128xf32, #tpu.memory_space<vmem>>, vector<8x128xf32>
    tpu.vector_store %arg11[%c0_91, %c0_92], %155 {strides = array<i32>} : memref<8x128xf32, #tpu.memory_space<vmem>>, vector<8x128xf32>,
    %c0_93 = arith.constant 0 : index
    %c0_94 = arith.constant 0 : index
    %164 = vector.load %arg12[%c0_93, %c0_94] : memref<8x128xf32, #tpu.memory_space<vmem>>, vector<8x128xf32>
    tpu.vector_store %arg12[%c0_93, %c0_94], %162 {strides = array<i32>} : memref<8x128xf32, #tpu.memory_space<vmem>>, vector<8x128xf32>,
    %165 = vector.broadcast %cst_12 : f32 to vector<8x128xf32>
    %166 = arith.subf %162, %165 : vector<8x128xf32>
    %cst_95 = arith.constant 0.000000e+00 : f32
    %167 = vector.broadcast %cst_95 : f32 to vector<8x128xf32>
    %168 = arith.cmpf ogt, %166, %167 : vector<8x128xf32>
    %169 = arith.extui %168 : vector<8x128xi1> to vector<8x128xi32>
    %170 = arith.sitofp %169 : vector<8x128xi32> to vector<8x128xf32>
    %171 = arith.index_cast %145 : i32 to index
    %c0_96 = arith.constant 0 : index
    %172 = vector.load %arg15[%171, %c0_96] : memref<64x128xf32, #tpu.memory_space<vmem>>, vector<8x128xf32>
    tpu.vector_store %arg15[%171, %c0_96], %170 {strides = array<i32>} : memref<64x128xf32, #tpu.memory_space<vmem>>, vector<8x128xf32>,
    %173 = vector.extract_strided_slice %162 {offsets = [0, 0], sizes = [1, 128], strides = [1, 1]} : vector<8x128xf32> to vector<1x128xf32>
    %174 = arith.index_cast %c4_i32 : i32 to index
    %c0_97 = arith.constant 0 : index
    %175 = vector.load %arg18[%174, %c0_97] : memref<8x128xf32, #tpu.memory_space<vmem>>, vector<1x128xf32>
    tpu.vector_store %arg18[%174, %c0_97], %173 {strides = array<i32>} : memref<8x128xf32, #tpu.memory_space<vmem>>, vector<1x128xf32>,
    %c5_i32 = arith.constant 5 : i32
    %c8_i32_98 = arith.constant 8 : i32
    %176 = arith.muli %c5_i32, %c8_i32_98 : i32
    %177 = tpu.assume_multiple %176, 8 : i32
    %178 = arith.index_cast %177 : i32 to index
    %c0_99 = arith.constant 0 : index
    %179 = vector.load %arg15[%178, %c0_99] : memref<64x128xf32, #tpu.memory_space<vmem>>, vector<8x128xf32>
    %c0_100 = arith.constant 0 : index
    %c0_101 = arith.constant 0 : index
    %180 = vector.load %arg12[%c0_100, %c0_101] : memref<8x128xf32, #tpu.memory_space<vmem>>, vector<8x128xf32>
    %181 = vector.broadcast %cst_12 : f32 to vector<8x128xf32>
    %182 = arith.subf %180, %181 : vector<8x128xf32>
    %cst_102 = arith.constant 0.000000e+00 : f32
    %183 = vector.broadcast %cst_102 : f32 to vector<8x128xf32>
    %184 = arith.cmpf ogt, %182, %183 : vector<8x128xf32>
    %c0_103 = arith.constant 0 : index
    %c0_104 = arith.constant 0 : index
    %185 = vector.load %arg11[%c0_103, %c0_104] : memref<8x128xf32, #tpu.memory_space<vmem>>, vector<8x128xf32>
    %186 = arith.mulf %5, %185 : vector<8x128xf32>
    %187 = arith.addf %186, %179 : vector<8x128xf32>
    %c0_105 = arith.constant 0 : index
    %c0_106 = arith.constant 0 : index
    %188 = vector.load %arg12[%c0_105, %c0_106] : memref<8x128xf32, #tpu.memory_space<vmem>>, vector<8x128xf32>
    %189 = arith.mulf %5, %188 : vector<8x128xf32>
    %190 = arith.addf %189, %187 : vector<8x128xf32>
    %cst_107 = arith.constant 0.000000e+00 : f32
    %191 = vector.broadcast %cst_12 : f32 to vector<8x128xf32>
    %192 = vector.broadcast %cst_107 : f32 to vector<8x128xf32>
    %193 = arith.select %184, %191, %192 : vector<8x128xi1>, vector<8x128xf32>
    %194 = arith.subf %190, %193 : vector<8x128xf32>
    %c0_108 = arith.constant 0 : index
    %c0_109 = arith.constant 0 : index
    %195 = vector.load %arg11[%c0_108, %c0_109] : memref<8x128xf32, #tpu.memory_space<vmem>>, vector<8x128xf32>
    tpu.vector_store %arg11[%c0_108, %c0_109], %187 {strides = array<i32>} : memref<8x128xf32, #tpu.memory_space<vmem>>, vector<8x128xf32>,
    %c0_110 = arith.constant 0 : index
    %c0_111 = arith.constant 0 : index
    %196 = vector.load %arg12[%c0_110, %c0_111] : memref<8x128xf32, #tpu.memory_space<vmem>>, vector<8x128xf32>
    tpu.vector_store %arg12[%c0_110, %c0_111], %194 {strides = array<i32>} : memref<8x128xf32, #tpu.memory_space<vmem>>, vector<8x128xf32>,
    %197 = vector.broadcast %cst_12 : f32 to vector<8x128xf32>
    %198 = arith.subf %194, %197 : vector<8x128xf32>
    %cst_112 = arith.constant 0.000000e+00 : f32
    %199 = vector.broadcast %cst_112 : f32 to vector<8x128xf32>
    %200 = arith.cmpf ogt, %198, %199 : vector<8x128xf32>
    %201 = arith.extui %200 : vector<8x128xi1> to vector<8x128xi32>
    %202 = arith.sitofp %201 : vector<8x128xi32> to vector<8x128xf32>
    %203 = arith.index_cast %177 : i32 to index
    %c0_113 = arith.constant 0 : index
    %204 = vector.load %arg15[%203, %c0_113] : memref<64x128xf32, #tpu.memory_space<vmem>>, vector<8x128xf32>
    tpu.vector_store %arg15[%203, %c0_113], %202 {strides = array<i32>} : memref<64x128xf32, #tpu.memory_space<vmem>>, vector<8x128xf32>,
    %205 = vector.extract_strided_slice %194 {offsets = [0, 0], sizes = [1, 128], strides = [1, 1]} : vector<8x128xf32> to vector<1x128xf32>
    %206 = arith.index_cast %c5_i32 : i32 to index
    %c0_114 = arith.constant 0 : index
    %207 = vector.load %arg18[%206, %c0_114] : memref<8x128xf32, #tpu.memory_space<vmem>>, vector<1x128xf32>
    tpu.vector_store %arg18[%206, %c0_114], %205 {strides = array<i32>} : memref<8x128xf32, #tpu.memory_space<vmem>>, vector<1x128xf32>,
    %c6_i32 = arith.constant 6 : i32
    %c8_i32_115 = arith.constant 8 : i32
    %208 = arith.muli %c6_i32, %c8_i32_115 : i32
    %209 = tpu.assume_multiple %208, 8 : i32
    %210 = arith.index_cast %209 : i32 to index
    %c0_116 = arith.constant 0 : index
    %211 = vector.load %arg15[%210, %c0_116] : memref<64x128xf32, #tpu.memory_space<vmem>>, vector<8x128xf32>
    %c0_117 = arith.constant 0 : index
    %c0_118 = arith.constant 0 : index
    %212 = vector.load %arg12[%c0_117, %c0_118] : memref<8x128xf32, #tpu.memory_space<vmem>>, vector<8x128xf32>
    %213 = vector.broadcast %cst_12 : f32 to vector<8x128xf32>
    %214 = arith.subf %212, %213 : vector<8x128xf32>
    %cst_119 = arith.constant 0.000000e+00 : f32
    %215 = vector.broadcast %cst_119 : f32 to vector<8x128xf32>
    %216 = arith.cmpf ogt, %214, %215 : vector<8x128xf32>
    %c0_120 = arith.constant 0 : index
    %c0_121 = arith.constant 0 : index
    %217 = vector.load %arg11[%c0_120, %c0_121] : memref<8x128xf32, #tpu.memory_space<vmem>>, vector<8x128xf32>
    %218 = arith.mulf %5, %217 : vector<8x128xf32>
    %219 = arith.addf %218, %211 : vector<8x128xf32>
    %c0_122 = arith.constant 0 : index
    %c0_123 = arith.constant 0 : index
    %220 = vector.load %arg12[%c0_122, %c0_123] : memref<8x128xf32, #tpu.memory_space<vmem>>, vector<8x128xf32>
    %221 = arith.mulf %5, %220 : vector<8x128xf32>
    %222 = arith.addf %221, %219 : vector<8x128xf32>
    %cst_124 = arith.constant 0.000000e+00 : f32
    %223 = vector.broadcast %cst_12 : f32 to vector<8x128xf32>
    %224 = vector.broadcast %cst_124 : f32 to vector<8x128xf32>
    %225 = arith.select %216, %223, %224 : vector<8x128xi1>, vector<8x128xf32>
    %226 = arith.subf %222, %225 : vector<8x128xf32>
    %c0_125 = arith.constant 0 : index
    %c0_126 = arith.constant 0 : index
    %227 = vector.load %arg11[%c0_125, %c0_126] : memref<8x128xf32, #tpu.memory_space<vmem>>, vector<8x128xf32>
    tpu.vector_store %arg11[%c0_125, %c0_126], %219 {strides = array<i32>} : memref<8x128xf32, #tpu.memory_space<vmem>>, vector<8x128xf32>,
    %c0_127 = arith.constant 0 : index
    %c0_128 = arith.constant 0 : index
    %228 = vector.load %arg12[%c0_127, %c0_128] : memref<8x128xf32, #tpu.memory_space<vmem>>, vector<8x128xf32>
    tpu.vector_store %arg12[%c0_127, %c0_128], %226 {strides = array<i32>} : memref<8x128xf32, #tpu.memory_space<vmem>>, vector<8x128xf32>,
    %229 = vector.broadcast %cst_12 : f32 to vector<8x128xf32>
    %230 = arith.subf %226, %229 : vector<8x128xf32>
    %cst_129 = arith.constant 0.000000e+00 : f32
    %231 = vector.broadcast %cst_129 : f32 to vector<8x128xf32>
    %232 = arith.cmpf ogt, %230, %231 : vector<8x128xf32>
    %233 = arith.extui %232 : vector<8x128xi1> to vector<8x128xi32>
    %234 = arith.sitofp %233 : vector<8x128xi32> to vector<8x128xf32>
    %235 = arith.index_cast %209 : i32 to index
    %c0_130 = arith.constant 0 : index
    %236 = vector.load %arg15[%235, %c0_130] : memref<64x128xf32, #tpu.memory_space<vmem>>, vector<8x128xf32>
    tpu.vector_store %arg15[%235, %c0_130], %234 {strides = array<i32>} : memref<64x128xf32, #tpu.memory_space<vmem>>, vector<8x128xf32>,
    %237 = vector.extract_strided_slice %226 {offsets = [0, 0], sizes = [1, 128], strides = [1, 1]} : vector<8x128xf32> to vector<1x128xf32>
    %238 = arith.index_cast %c6_i32 : i32 to index
    %c0_131 = arith.constant 0 : index
    %239 = vector.load %arg18[%238, %c0_131] : memref<8x128xf32, #tpu.memory_space<vmem>>, vector<1x128xf32>
    tpu.vector_store %arg18[%238, %c0_131], %237 {strides = array<i32>} : memref<8x128xf32, #tpu.memory_space<vmem>>, vector<1x128xf32>,
    %c7_i32 = arith.constant 7 : i32
    %c8_i32_132 = arith.constant 8 : i32
    %240 = arith.muli %c7_i32, %c8_i32_132 : i32
    %241 = tpu.assume_multiple %240, 8 : i32
    %242 = arith.index_cast %241 : i32 to index
    %c0_133 = arith.constant 0 : index
    %243 = vector.load %arg15[%242, %c0_133] : memref<64x128xf32, #tpu.memory_space<vmem>>, vector<8x128xf32>
    %c0_134 = arith.constant 0 : index
    %c0_135 = arith.constant 0 : index
    %244 = vector.load %arg12[%c0_134, %c0_135] : memref<8x128xf32, #tpu.memory_space<vmem>>, vector<8x128xf32>
    %245 = vector.broadcast %cst_12 : f32 to vector<8x128xf32>
    %246 = arith.subf %244, %245 : vector<8x128xf32>
    %cst_136 = arith.constant 0.000000e+00 : f32
    %247 = vector.broadcast %cst_136 : f32 to vector<8x128xf32>
    %248 = arith.cmpf ogt, %246, %247 : vector<8x128xf32>
    %c0_137 = arith.constant 0 : index
    %c0_138 = arith.constant 0 : index
    %249 = vector.load %arg11[%c0_137, %c0_138] : memref<8x128xf32, #tpu.memory_space<vmem>>, vector<8x128xf32>
    %250 = arith.mulf %5, %249 : vector<8x128xf32>
    %251 = arith.addf %250, %243 : vector<8x128xf32>
    %c0_139 = arith.constant 0 : index
    %c0_140 = arith.constant 0 : index
    %252 = vector.load %arg12[%c0_139, %c0_140] : memref<8x128xf32, #tpu.memory_space<vmem>>, vector<8x128xf32>
    %253 = arith.mulf %5, %252 : vector<8x128xf32>
    %254 = arith.addf %253, %251 : vector<8x128xf32>
    %cst_141 = arith.constant 0.000000e+00 : f32
    %255 = vector.broadcast %cst_12 : f32 to vector<8x128xf32>
    %256 = vector.broadcast %cst_141 : f32 to vector<8x128xf32>
    %257 = arith.select %248, %255, %256 : vector<8x128xi1>, vector<8x128xf32>
    %258 = arith.subf %254, %257 : vector<8x128xf32>
    %c0_142 = arith.constant 0 : index
    %c0_143 = arith.constant 0 : index
    %259 = vector.load %arg11[%c0_142, %c0_143] : memref<8x128xf32, #tpu.memory_space<vmem>>, vector<8x128xf32>
    tpu.vector_store %arg11[%c0_142, %c0_143], %251 {strides = array<i32>} : memref<8x128xf32, #tpu.memory_space<vmem>>, vector<8x128xf32>,
    %c0_144 = arith.constant 0 : index
    %c0_145 = arith.constant 0 : index
    %260 = vector.load %arg12[%c0_144, %c0_145] : memref<8x128xf32, #tpu.memory_space<vmem>>, vector<8x128xf32>
    tpu.vector_store %arg12[%c0_144, %c0_145], %258 {strides = array<i32>} : memref<8x128xf32, #tpu.memory_space<vmem>>, vector<8x128xf32>,
    %261 = vector.broadcast %cst_12 : f32 to vector<8x128xf32>
    %262 = arith.subf %258, %261 : vector<8x128xf32>
    %cst_146 = arith.constant 0.000000e+00 : f32
    %263 = vector.broadcast %cst_146 : f32 to vector<8x128xf32>
    %264 = arith.cmpf ogt, %262, %263 : vector<8x128xf32>
    %265 = arith.extui %264 : vector<8x128xi1> to vector<8x128xi32>
    %266 = arith.sitofp %265 : vector<8x128xi32> to vector<8x128xf32>
    %267 = arith.index_cast %241 : i32 to index
    %c0_147 = arith.constant 0 : index
    %268 = vector.load %arg15[%267, %c0_147] : memref<64x128xf32, #tpu.memory_space<vmem>>, vector<8x128xf32>
    tpu.vector_store %arg15[%267, %c0_147], %266 {strides = array<i32>} : memref<64x128xf32, #tpu.memory_space<vmem>>, vector<8x128xf32>,
    %269 = vector.extract_strided_slice %258 {offsets = [0, 0], sizes = [1, 128], strides = [1, 1]} : vector<8x128xf32> to vector<1x128xf32>
    %270 = arith.index_cast %c7_i32 : i32 to index
    %c0_148 = arith.constant 0 : index
    %271 = vector.load %arg18[%270, %c0_148] : memref<8x128xf32, #tpu.memory_space<vmem>>, vector<1x128xf32>
    tpu.vector_store %arg18[%270, %c0_148], %269 {strides = array<i32>} : memref<8x128xf32, #tpu.memory_space<vmem>>, vector<1x128xf32>,
    %c8_i32_149 = arith.constant 8 : i32
    %c0_150 = arith.constant 0 : index
    %c0_151 = arith.constant 0 : index
    %272 = vector.load %arg15[%c0_150, %c0_151] : memref<64x128xf32, #tpu.memory_space<vmem>>, vector<64x128xf32>
    %c0_152 = arith.constant 0 : index
    %c0_153 = arith.constant 0 : index
    %273 = vector.load %arg5[%c0_152, %c0_153] : memref<128x128xf32, #tpu.memory_space<vmem>>, vector<128x128xf32>
    %cst_154 = arith.constant dense<0.000000e+00> : vector<64x128xf32>
    %274 = tpu.matmul %272, %273, %cst_154 {dimension_numbers = #tpu.dot_dimension_numbers<[1], [0], [0], [1], [0, 0, 1, 1], [], []>} : vector<64x128xf32>, vector<128x128xf32>, vector<64x128xf32> -> vector<64x128xf32>
    %c0_155 = arith.constant 0 : index
    %c0_156 = arith.constant 0 : index
    %275 = vector.load %arg6[%c0_155, %c0_156] : memref<1x128xf32, #tpu.memory_space<vmem>>, vector<1x128xf32>
    %276 = vector.broadcast %275 : vector<1x128xf32> to vector<64x128xf32>
    %277 = arith.addf %274, %276 : vector<64x128xf32>
    %c0_157 = arith.constant 0 : index
    %c0_158 = arith.constant 0 : index
    %278 = vector.load %arg16[%c0_157, %c0_158] : memref<64x128xf32, #tpu.memory_space<vmem>>, vector<64x128xf32>
    tpu.vector_store %arg16[%c0_157, %c0_158], %277 {strides = array<i32>} : memref<64x128xf32, #tpu.memory_space<vmem>>, vector<64x128xf32>,
    %cst_159 = arith.constant 1.000000e+00 : f32
    %c0_i32_160 = arith.constant 0 : i32
    %c8_i32_161 = arith.constant 8 : i32
    %279 = arith.muli %c0_i32_160, %c8_i32_161 : i32
    %280 = tpu.assume_multiple %279, 8 : i32
    %281 = arith.index_cast %280 : i32 to index
    %c0_162 = arith.constant 0 : index
    %282 = vector.load %arg16[%281, %c0_162] : memref<64x128xf32, #tpu.memory_space<vmem>>, vector<8x128xf32>
    %c0_163 = arith.constant 0 : index
    %c0_164 = arith.constant 0 : index
    %283 = vector.load %arg14[%c0_163, %c0_164] : memref<8x128xf32, #tpu.memory_space<vmem>>, vector<8x128xf32>
    %284 = vector.broadcast %cst_159 : f32 to vector<8x128xf32>
    %285 = arith.subf %283, %284 : vector<8x128xf32>
    %cst_165 = arith.constant 0.000000e+00 : f32
    %286 = vector.broadcast %cst_165 : f32 to vector<8x128xf32>
    %287 = arith.cmpf ogt, %285, %286 : vector<8x128xf32>
    %c0_166 = arith.constant 0 : index
    %c0_167 = arith.constant 0 : index
    %288 = vector.load %arg13[%c0_166, %c0_167] : memref<8x128xf32, #tpu.memory_space<vmem>>, vector<8x128xf32>
    %289 = arith.mulf %8, %288 : vector<8x128xf32>
    %290 = arith.addf %289, %282 : vector<8x128xf32>
    %c0_168 = arith.constant 0 : index
    %c0_169 = arith.constant 0 : index
    %291 = vector.load %arg14[%c0_168, %c0_169] : memref<8x128xf32, #tpu.memory_space<vmem>>, vector<8x128xf32>
    %292 = arith.mulf %8, %291 : vector<8x128xf32>
    %293 = arith.addf %292, %290 : vector<8x128xf32>
    %cst_170 = arith.constant 0.000000e+00 : f32
    %294 = vector.broadcast %cst_159 : f32 to vector<8x128xf32>
    %295 = vector.broadcast %cst_170 : f32 to vector<8x128xf32>
    %296 = arith.select %287, %294, %295 : vector<8x128xi1>, vector<8x128xf32>
    %297 = arith.subf %293, %296 : vector<8x128xf32>
    %c0_171 = arith.constant 0 : index
    %c0_172 = arith.constant 0 : index
    %298 = vector.load %arg13[%c0_171, %c0_172] : memref<8x128xf32, #tpu.memory_space<vmem>>, vector<8x128xf32>
    tpu.vector_store %arg13[%c0_171, %c0_172], %290 {strides = array<i32>} : memref<8x128xf32, #tpu.memory_space<vmem>>, vector<8x128xf32>,
    %c0_173 = arith.constant 0 : index
    %c0_174 = arith.constant 0 : index
    %299 = vector.load %arg14[%c0_173, %c0_174] : memref<8x128xf32, #tpu.memory_space<vmem>>, vector<8x128xf32>
    tpu.vector_store %arg14[%c0_173, %c0_174], %297 {strides = array<i32>} : memref<8x128xf32, #tpu.memory_space<vmem>>, vector<8x128xf32>,
    %300 = vector.broadcast %cst_159 : f32 to vector<8x128xf32>
    %301 = arith.subf %297, %300 : vector<8x128xf32>
    %cst_175 = arith.constant 0.000000e+00 : f32
    %302 = vector.broadcast %cst_175 : f32 to vector<8x128xf32>
    %303 = arith.cmpf ogt, %301, %302 : vector<8x128xf32>
    %304 = vector.shape_cast %303 : vector<8x128xi1> to vector<1x8x128xi1>
    %305 = arith.extui %304 : vector<1x8x128xi1> to vector<1x8x128xi32>
    %306 = arith.sitofp %305 : vector<1x8x128xi32> to vector<1x8x128xf32>
    %307 = arith.index_cast %c0_i32_160 : i32 to index
    %c0_176 = arith.constant 0 : index
    %c0_177 = arith.constant 0 : index
    %308 = vector.load %arg17[%307, %c0_176, %c0_177] : memref<8x8x128xf32, #tpu.memory_space<vmem>>, vector<1x8x128xf32>
    tpu.vector_store %arg17[%307, %c0_176, %c0_177], %306 {strides = array<i32>} : memref<8x8x128xf32, #tpu.memory_space<vmem>>, vector<1x8x128xf32>,
    %c1_i32_178 = arith.constant 1 : i32
    %c8_i32_179 = arith.constant 8 : i32
    %309 = arith.muli %c1_i32_178, %c8_i32_179 : i32
    %310 = tpu.assume_multiple %309, 8 : i32
    %311 = arith.index_cast %310 : i32 to index
    %c0_180 = arith.constant 0 : index
    %312 = vector.load %arg16[%311, %c0_180] : memref<64x128xf32, #tpu.memory_space<vmem>>, vector<8x128xf32>
    %c0_181 = arith.constant 0 : index
    %c0_182 = arith.constant 0 : index
    %313 = vector.load %arg14[%c0_181, %c0_182] : memref<8x128xf32, #tpu.memory_space<vmem>>, vector<8x128xf32>
    %314 = vector.broadcast %cst_159 : f32 to vector<8x128xf32>
    %315 = arith.subf %313, %314 : vector<8x128xf32>
    %cst_183 = arith.constant 0.000000e+00 : f32
    %316 = vector.broadcast %cst_183 : f32 to vector<8x128xf32>
    %317 = arith.cmpf ogt, %315, %316 : vector<8x128xf32>
    %c0_184 = arith.constant 0 : index
    %c0_185 = arith.constant 0 : index
    %318 = vector.load %arg13[%c0_184, %c0_185] : memref<8x128xf32, #tpu.memory_space<vmem>>, vector<8x128xf32>
    %319 = arith.mulf %8, %318 : vector<8x128xf32>
    %320 = arith.addf %319, %312 : vector<8x128xf32>
    %c0_186 = arith.constant 0 : index
    %c0_187 = arith.constant 0 : index
    %321 = vector.load %arg14[%c0_186, %c0_187] : memref<8x128xf32, #tpu.memory_space<vmem>>, vector<8x128xf32>
    %322 = arith.mulf %8, %321 : vector<8x128xf32>
    %323 = arith.addf %322, %320 : vector<8x128xf32>
    %cst_188 = arith.constant 0.000000e+00 : f32
    %324 = vector.broadcast %cst_159 : f32 to vector<8x128xf32>
    %325 = vector.broadcast %cst_188 : f32 to vector<8x128xf32>
    %326 = arith.select %317, %324, %325 : vector<8x128xi1>, vector<8x128xf32>
    %327 = arith.subf %323, %326 : vector<8x128xf32>
    %c0_189 = arith.constant 0 : index
    %c0_190 = arith.constant 0 : index
    %328 = vector.load %arg13[%c0_189, %c0_190] : memref<8x128xf32, #tpu.memory_space<vmem>>, vector<8x128xf32>
    tpu.vector_store %arg13[%c0_189, %c0_190], %320 {strides = array<i32>} : memref<8x128xf32, #tpu.memory_space<vmem>>, vector<8x128xf32>,
    %c0_191 = arith.constant 0 : index
    %c0_192 = arith.constant 0 : index
    %329 = vector.load %arg14[%c0_191, %c0_192] : memref<8x128xf32, #tpu.memory_space<vmem>>, vector<8x128xf32>
    tpu.vector_store %arg14[%c0_191, %c0_192], %327 {strides = array<i32>} : memref<8x128xf32, #tpu.memory_space<vmem>>, vector<8x128xf32>,
    %330 = vector.broadcast %cst_159 : f32 to vector<8x128xf32>
    %331 = arith.subf %327, %330 : vector<8x128xf32>
    %cst_193 = arith.constant 0.000000e+00 : f32
    %332 = vector.broadcast %cst_193 : f32 to vector<8x128xf32>
    %333 = arith.cmpf ogt, %331, %332 : vector<8x128xf32>
    %334 = vector.shape_cast %333 : vector<8x128xi1> to vector<1x8x128xi1>
    %335 = arith.extui %334 : vector<1x8x128xi1> to vector<1x8x128xi32>
    %336 = arith.sitofp %335 : vector<1x8x128xi32> to vector<1x8x128xf32>
    %337 = arith.index_cast %c1_i32_178 : i32 to index
    %c0_194 = arith.constant 0 : index
    %c0_195 = arith.constant 0 : index
    %338 = vector.load %arg17[%337, %c0_194, %c0_195] : memref<8x8x128xf32, #tpu.memory_space<vmem>>, vector<1x8x128xf32>
    tpu.vector_store %arg17[%337, %c0_194, %c0_195], %336 {strides = array<i32>} : memref<8x8x128xf32, #tpu.memory_space<vmem>>, vector<1x8x128xf32>,
    %c2_i32_196 = arith.constant 2 : i32
    %c8_i32_197 = arith.constant 8 : i32
    %339 = arith.muli %c2_i32_196, %c8_i32_197 : i32
    %340 = tpu.assume_multiple %339, 8 : i32
    %341 = arith.index_cast %340 : i32 to index
    %c0_198 = arith.constant 0 : index
    %342 = vector.load %arg16[%341, %c0_198] : memref<64x128xf32, #tpu.memory_space<vmem>>, vector<8x128xf32>
    %c0_199 = arith.constant 0 : index
    %c0_200 = arith.constant 0 : index
    %343 = vector.load %arg14[%c0_199, %c0_200] : memref<8x128xf32, #tpu.memory_space<vmem>>, vector<8x128xf32>
    %344 = vector.broadcast %cst_159 : f32 to vector<8x128xf32>
    %345 = arith.subf %343, %344 : vector<8x128xf32>
    %cst_201 = arith.constant 0.000000e+00 : f32
    %346 = vector.broadcast %cst_201 : f32 to vector<8x128xf32>
    %347 = arith.cmpf ogt, %345, %346 : vector<8x128xf32>
    %c0_202 = arith.constant 0 : index
    %c0_203 = arith.constant 0 : index
    %348 = vector.load %arg13[%c0_202, %c0_203] : memref<8x128xf32, #tpu.memory_space<vmem>>, vector<8x128xf32>
    %349 = arith.mulf %8, %348 : vector<8x128xf32>
    %350 = arith.addf %349, %342 : vector<8x128xf32>
    %c0_204 = arith.constant 0 : index
    %c0_205 = arith.constant 0 : index
    %351 = vector.load %arg14[%c0_204, %c0_205] : memref<8x128xf32, #tpu.memory_space<vmem>>, vector<8x128xf32>
    %352 = arith.mulf %8, %351 : vector<8x128xf32>
    %353 = arith.addf %352, %350 : vector<8x128xf32>
    %cst_206 = arith.constant 0.000000e+00 : f32
    %354 = vector.broadcast %cst_159 : f32 to vector<8x128xf32>
    %355 = vector.broadcast %cst_206 : f32 to vector<8x128xf32>
    %356 = arith.select %347, %354, %355 : vector<8x128xi1>, vector<8x128xf32>
    %357 = arith.subf %353, %356 : vector<8x128xf32>
    %c0_207 = arith.constant 0 : index
    %c0_208 = arith.constant 0 : index
    %358 = vector.load %arg13[%c0_207, %c0_208] : memref<8x128xf32, #tpu.memory_space<vmem>>, vector<8x128xf32>
    tpu.vector_store %arg13[%c0_207, %c0_208], %350 {strides = array<i32>} : memref<8x128xf32, #tpu.memory_space<vmem>>, vector<8x128xf32>,
    %c0_209 = arith.constant 0 : index
    %c0_210 = arith.constant 0 : index
    %359 = vector.load %arg14[%c0_209, %c0_210] : memref<8x128xf32, #tpu.memory_space<vmem>>, vector<8x128xf32>
    tpu.vector_store %arg14[%c0_209, %c0_210], %357 {strides = array<i32>} : memref<8x128xf32, #tpu.memory_space<vmem>>, vector<8x128xf32>,
    %360 = vector.broadcast %cst_159 : f32 to vector<8x128xf32>
    %361 = arith.subf %357, %360 : vector<8x128xf32>
    %cst_211 = arith.constant 0.000000e+00 : f32
    %362 = vector.broadcast %cst_211 : f32 to vector<8x128xf32>
    %363 = arith.cmpf ogt, %361, %362 : vector<8x128xf32>
    %364 = vector.shape_cast %363 : vector<8x128xi1> to vector<1x8x128xi1>
    %365 = arith.extui %364 : vector<1x8x128xi1> to vector<1x8x128xi32>
    %366 = arith.sitofp %365 : vector<1x8x128xi32> to vector<1x8x128xf32>
    %367 = arith.index_cast %c2_i32_196 : i32 to index
    %c0_212 = arith.constant 0 : index
    %c0_213 = arith.constant 0 : index
    %368 = vector.load %arg17[%367, %c0_212, %c0_213] : memref<8x8x128xf32, #tpu.memory_space<vmem>>, vector<1x8x128xf32>
    tpu.vector_store %arg17[%367, %c0_212, %c0_213], %366 {strides = array<i32>} : memref<8x8x128xf32, #tpu.memory_space<vmem>>, vector<1x8x128xf32>,
    %c3_i32_214 = arith.constant 3 : i32
    %c8_i32_215 = arith.constant 8 : i32
    %369 = arith.muli %c3_i32_214, %c8_i32_215 : i32
    %370 = tpu.assume_multiple %369, 8 : i32
    %371 = arith.index_cast %370 : i32 to index
    %c0_216 = arith.constant 0 : index
    %372 = vector.load %arg16[%371, %c0_216] : memref<64x128xf32, #tpu.memory_space<vmem>>, vector<8x128xf32>
    %c0_217 = arith.constant 0 : index
    %c0_218 = arith.constant 0 : index
    %373 = vector.load %arg14[%c0_217, %c0_218] : memref<8x128xf32, #tpu.memory_space<vmem>>, vector<8x128xf32>
    %374 = vector.broadcast %cst_159 : f32 to vector<8x128xf32>
    %375 = arith.subf %373, %374 : vector<8x128xf32>
    %cst_219 = arith.constant 0.000000e+00 : f32
    %376 = vector.broadcast %cst_219 : f32 to vector<8x128xf32>
    %377 = arith.cmpf ogt, %375, %376 : vector<8x128xf32>
    %c0_220 = arith.constant 0 : index
    %c0_221 = arith.constant 0 : index
    %378 = vector.load %arg13[%c0_220, %c0_221] : memref<8x128xf32, #tpu.memory_space<vmem>>, vector<8x128xf32>
    %379 = arith.mulf %8, %378 : vector<8x128xf32>
    %380 = arith.addf %379, %372 : vector<8x128xf32>
    %c0_222 = arith.constant 0 : index
    %c0_223 = arith.constant 0 : index
    %381 = vector.load %arg14[%c0_222, %c0_223] : memref<8x128xf32, #tpu.memory_space<vmem>>, vector<8x128xf32>
    %382 = arith.mulf %8, %381 : vector<8x128xf32>
    %383 = arith.addf %382, %380 : vector<8x128xf32>
    %cst_224 = arith.constant 0.000000e+00 : f32
    %384 = vector.broadcast %cst_159 : f32 to vector<8x128xf32>
    %385 = vector.broadcast %cst_224 : f32 to vector<8x128xf32>
    %386 = arith.select %377, %384, %385 : vector<8x128xi1>, vector<8x128xf32>
    %387 = arith.subf %383, %386 : vector<8x128xf32>
    %c0_225 = arith.constant 0 : index
    %c0_226 = arith.constant 0 : index
    %388 = vector.load %arg13[%c0_225, %c0_226] : memref<8x128xf32, #tpu.memory_space<vmem>>, vector<8x128xf32>
    tpu.vector_store %arg13[%c0_225, %c0_226], %380 {strides = array<i32>} : memref<8x128xf32, #tpu.memory_space<vmem>>, vector<8x128xf32>,
    %c0_227 = arith.constant 0 : index
    %c0_228 = arith.constant 0 : index
    %389 = vector.load %arg14[%c0_227, %c0_228] : memref<8x128xf32, #tpu.memory_space<vmem>>, vector<8x128xf32>
    tpu.vector_store %arg14[%c0_227, %c0_228], %387 {strides = array<i32>} : memref<8x128xf32, #tpu.memory_space<vmem>>, vector<8x128xf32>,
    %390 = vector.broadcast %cst_159 : f32 to vector<8x128xf32>
    %391 = arith.subf %387, %390 : vector<8x128xf32>
    %cst_229 = arith.constant 0.000000e+00 : f32
    %392 = vector.broadcast %cst_229 : f32 to vector<8x128xf32>
    %393 = arith.cmpf ogt, %391, %392 : vector<8x128xf32>
    %394 = vector.shape_cast %393 : vector<8x128xi1> to vector<1x8x128xi1>
    %395 = arith.extui %394 : vector<1x8x128xi1> to vector<1x8x128xi32>
    %396 = arith.sitofp %395 : vector<1x8x128xi32> to vector<1x8x128xf32>
    %397 = arith.index_cast %c3_i32_214 : i32 to index
    %c0_230 = arith.constant 0 : index
    %c0_231 = arith.constant 0 : index
    %398 = vector.load %arg17[%397, %c0_230, %c0_231] : memref<8x8x128xf32, #tpu.memory_space<vmem>>, vector<1x8x128xf32>
    tpu.vector_store %arg17[%397, %c0_230, %c0_231], %396 {strides = array<i32>} : memref<8x8x128xf32, #tpu.memory_space<vmem>>, vector<1x8x128xf32>,
    %c4_i32_232 = arith.constant 4 : i32
    %c8_i32_233 = arith.constant 8 : i32
    %399 = arith.muli %c4_i32_232, %c8_i32_233 : i32
    %400 = tpu.assume_multiple %399, 8 : i32
    %401 = arith.index_cast %400 : i32 to index
    %c0_234 = arith.constant 0 : index
    %402 = vector.load %arg16[%401, %c0_234] : memref<64x128xf32, #tpu.memory_space<vmem>>, vector<8x128xf32>
    %c0_235 = arith.constant 0 : index
    %c0_236 = arith.constant 0 : index
    %403 = vector.load %arg14[%c0_235, %c0_236] : memref<8x128xf32, #tpu.memory_space<vmem>>, vector<8x128xf32>
    %404 = vector.broadcast %cst_159 : f32 to vector<8x128xf32>
    %405 = arith.subf %403, %404 : vector<8x128xf32>
    %cst_237 = arith.constant 0.000000e+00 : f32
    %406 = vector.broadcast %cst_237 : f32 to vector<8x128xf32>
    %407 = arith.cmpf ogt, %405, %406 : vector<8x128xf32>
    %c0_238 = arith.constant 0 : index
    %c0_239 = arith.constant 0 : index
    %408 = vector.load %arg13[%c0_238, %c0_239] : memref<8x128xf32, #tpu.memory_space<vmem>>, vector<8x128xf32>
    %409 = arith.mulf %8, %408 : vector<8x128xf32>
    %410 = arith.addf %409, %402 : vector<8x128xf32>
    %c0_240 = arith.constant 0 : index
    %c0_241 = arith.constant 0 : index
    %411 = vector.load %arg14[%c0_240, %c0_241] : memref<8x128xf32, #tpu.memory_space<vmem>>, vector<8x128xf32>
    %412 = arith.mulf %8, %411 : vector<8x128xf32>
    %413 = arith.addf %412, %410 : vector<8x128xf32>
    %cst_242 = arith.constant 0.000000e+00 : f32
    %414 = vector.broadcast %cst_159 : f32 to vector<8x128xf32>
    %415 = vector.broadcast %cst_242 : f32 to vector<8x128xf32>
    %416 = arith.select %407, %414, %415 : vector<8x128xi1>, vector<8x128xf32>
    %417 = arith.subf %413, %416 : vector<8x128xf32>
    %c0_243 = arith.constant 0 : index
    %c0_244 = arith.constant 0 : index
    %418 = vector.load %arg13[%c0_243, %c0_244] : memref<8x128xf32, #tpu.memory_space<vmem>>, vector<8x128xf32>
    tpu.vector_store %arg13[%c0_243, %c0_244], %410 {strides = array<i32>} : memref<8x128xf32, #tpu.memory_space<vmem>>, vector<8x128xf32>,
    %c0_245 = arith.constant 0 : index
    %c0_246 = arith.constant 0 : index
    %419 = vector.load %arg14[%c0_245, %c0_246] : memref<8x128xf32, #tpu.memory_space<vmem>>, vector<8x128xf32>
    tpu.vector_store %arg14[%c0_245, %c0_246], %417 {strides = array<i32>} : memref<8x128xf32, #tpu.memory_space<vmem>>, vector<8x128xf32>,
    %420 = vector.broadcast %cst_159 : f32 to vector<8x128xf32>
    %421 = arith.subf %417, %420 : vector<8x128xf32>
    %cst_247 = arith.constant 0.000000e+00 : f32
    %422 = vector.broadcast %cst_247 : f32 to vector<8x128xf32>
    %423 = arith.cmpf ogt, %421, %422 : vector<8x128xf32>
    %424 = vector.shape_cast %423 : vector<8x128xi1> to vector<1x8x128xi1>
    %425 = arith.extui %424 : vector<1x8x128xi1> to vector<1x8x128xi32>
    %426 = arith.sitofp %425 : vector<1x8x128xi32> to vector<1x8x128xf32>
    %427 = arith.index_cast %c4_i32_232 : i32 to index
    %c0_248 = arith.constant 0 : index
    %c0_249 = arith.constant 0 : index
    %428 = vector.load %arg17[%427, %c0_248, %c0_249] : memref<8x8x128xf32, #tpu.memory_space<vmem>>, vector<1x8x128xf32>
    tpu.vector_store %arg17[%427, %c0_248, %c0_249], %426 {strides = array<i32>} : memref<8x8x128xf32, #tpu.memory_space<vmem>>, vector<1x8x128xf32>,
    %c5_i32_250 = arith.constant 5 : i32
    %c8_i32_251 = arith.constant 8 : i32
    %429 = arith.muli %c5_i32_250, %c8_i32_251 : i32
    %430 = tpu.assume_multiple %429, 8 : i32
    %431 = arith.index_cast %430 : i32 to index
    %c0_252 = arith.constant 0 : index
    %432 = vector.load %arg16[%431, %c0_252] : memref<64x128xf32, #tpu.memory_space<vmem>>, vector<8x128xf32>
    %c0_253 = arith.constant 0 : index
    %c0_254 = arith.constant 0 : index
    %433 = vector.load %arg14[%c0_253, %c0_254] : memref<8x128xf32, #tpu.memory_space<vmem>>, vector<8x128xf32>
    %434 = vector.broadcast %cst_159 : f32 to vector<8x128xf32>
    %435 = arith.subf %433, %434 : vector<8x128xf32>
    %cst_255 = arith.constant 0.000000e+00 : f32
    %436 = vector.broadcast %cst_255 : f32 to vector<8x128xf32>
    %437 = arith.cmpf ogt, %435, %436 : vector<8x128xf32>
    %c0_256 = arith.constant 0 : index
    %c0_257 = arith.constant 0 : index
    %438 = vector.load %arg13[%c0_256, %c0_257] : memref<8x128xf32, #tpu.memory_space<vmem>>, vector<8x128xf32>
    %439 = arith.mulf %8, %438 : vector<8x128xf32>
    %440 = arith.addf %439, %432 : vector<8x128xf32>
    %c0_258 = arith.constant 0 : index
    %c0_259 = arith.constant 0 : index
    %441 = vector.load %arg14[%c0_258, %c0_259] : memref<8x128xf32, #tpu.memory_space<vmem>>, vector<8x128xf32>
    %442 = arith.mulf %8, %441 : vector<8x128xf32>
    %443 = arith.addf %442, %440 : vector<8x128xf32>
    %cst_260 = arith.constant 0.000000e+00 : f32
    %444 = vector.broadcast %cst_159 : f32 to vector<8x128xf32>
    %445 = vector.broadcast %cst_260 : f32 to vector<8x128xf32>
    %446 = arith.select %437, %444, %445 : vector<8x128xi1>, vector<8x128xf32>
    %447 = arith.subf %443, %446 : vector<8x128xf32>
    %c0_261 = arith.constant 0 : index
    %c0_262 = arith.constant 0 : index
    %448 = vector.load %arg13[%c0_261, %c0_262] : memref<8x128xf32, #tpu.memory_space<vmem>>, vector<8x128xf32>
    tpu.vector_store %arg13[%c0_261, %c0_262], %440 {strides = array<i32>} : memref<8x128xf32, #tpu.memory_space<vmem>>, vector<8x128xf32>,
    %c0_263 = arith.constant 0 : index
    %c0_264 = arith.constant 0 : index
    %449 = vector.load %arg14[%c0_263, %c0_264] : memref<8x128xf32, #tpu.memory_space<vmem>>, vector<8x128xf32>
    tpu.vector_store %arg14[%c0_263, %c0_264], %447 {strides = array<i32>} : memref<8x128xf32, #tpu.memory_space<vmem>>, vector<8x128xf32>,
    %450 = vector.broadcast %cst_159 : f32 to vector<8x128xf32>
    %451 = arith.subf %447, %450 : vector<8x128xf32>
    %cst_265 = arith.constant 0.000000e+00 : f32
    %452 = vector.broadcast %cst_265 : f32 to vector<8x128xf32>
    %453 = arith.cmpf ogt, %451, %452 : vector<8x128xf32>
    %454 = vector.shape_cast %453 : vector<8x128xi1> to vector<1x8x128xi1>
    %455 = arith.extui %454 : vector<1x8x128xi1> to vector<1x8x128xi32>
    %456 = arith.sitofp %455 : vector<1x8x128xi32> to vector<1x8x128xf32>
    %457 = arith.index_cast %c5_i32_250 : i32 to index
    %c0_266 = arith.constant 0 : index
    %c0_267 = arith.constant 0 : index
    %458 = vector.load %arg17[%457, %c0_266, %c0_267] : memref<8x8x128xf32, #tpu.memory_space<vmem>>, vector<1x8x128xf32>
    tpu.vector_store %arg17[%457, %c0_266, %c0_267], %456 {strides = array<i32>} : memref<8x8x128xf32, #tpu.memory_space<vmem>>, vector<1x8x128xf32>,
    %c6_i32_268 = arith.constant 6 : i32
    %c8_i32_269 = arith.constant 8 : i32
    %459 = arith.muli %c6_i32_268, %c8_i32_269 : i32
    %460 = tpu.assume_multiple %459, 8 : i32
    %461 = arith.index_cast %460 : i32 to index
    %c0_270 = arith.constant 0 : index
    %462 = vector.load %arg16[%461, %c0_270] : memref<64x128xf32, #tpu.memory_space<vmem>>, vector<8x128xf32>
    %c0_271 = arith.constant 0 : index
    %c0_272 = arith.constant 0 : index
    %463 = vector.load %arg14[%c0_271, %c0_272] : memref<8x128xf32, #tpu.memory_space<vmem>>, vector<8x128xf32>
    %464 = vector.broadcast %cst_159 : f32 to vector<8x128xf32>
    %465 = arith.subf %463, %464 : vector<8x128xf32>
    %cst_273 = arith.constant 0.000000e+00 : f32
    %466 = vector.broadcast %cst_273 : f32 to vector<8x128xf32>
    %467 = arith.cmpf ogt, %465, %466 : vector<8x128xf32>
    %c0_274 = arith.constant 0 : index
    %c0_275 = arith.constant 0 : index
    %468 = vector.load %arg13[%c0_274, %c0_275] : memref<8x128xf32, #tpu.memory_space<vmem>>, vector<8x128xf32>
    %469 = arith.mulf %8, %468 : vector<8x128xf32>
    %470 = arith.addf %469, %462 : vector<8x128xf32>
    %c0_276 = arith.constant 0 : index
    %c0_277 = arith.constant 0 : index
    %471 = vector.load %arg14[%c0_276, %c0_277] : memref<8x128xf32, #tpu.memory_space<vmem>>, vector<8x128xf32>
    %472 = arith.mulf %8, %471 : vector<8x128xf32>
    %473 = arith.addf %472, %470 : vector<8x128xf32>
    %cst_278 = arith.constant 0.000000e+00 : f32
    %474 = vector.broadcast %cst_159 : f32 to vector<8x128xf32>
    %475 = vector.broadcast %cst_278 : f32 to vector<8x128xf32>
    %476 = arith.select %467, %474, %475 : vector<8x128xi1>, vector<8x128xf32>
    %477 = arith.subf %473, %476 : vector<8x128xf32>
    %c0_279 = arith.constant 0 : index
    %c0_280 = arith.constant 0 : index
    %478 = vector.load %arg13[%c0_279, %c0_280] : memref<8x128xf32, #tpu.memory_space<vmem>>, vector<8x128xf32>
    tpu.vector_store %arg13[%c0_279, %c0_280], %470 {strides = array<i32>} : memref<8x128xf32, #tpu.memory_space<vmem>>, vector<8x128xf32>,
    %c0_281 = arith.constant 0 : index
    %c0_282 = arith.constant 0 : index
    %479 = vector.load %arg14[%c0_281, %c0_282] : memref<8x128xf32, #tpu.memory_space<vmem>>, vector<8x128xf32>
    tpu.vector_store %arg14[%c0_281, %c0_282], %477 {strides = array<i32>} : memref<8x128xf32, #tpu.memory_space<vmem>>, vector<8x128xf32>,
    %480 = vector.broadcast %cst_159 : f32 to vector<8x128xf32>
    %481 = arith.subf %477, %480 : vector<8x128xf32>
    %cst_283 = arith.constant 0.000000e+00 : f32
    %482 = vector.broadcast %cst_283 : f32 to vector<8x128xf32>
    %483 = arith.cmpf ogt, %481, %482 : vector<8x128xf32>
    %484 = vector.shape_cast %483 : vector<8x128xi1> to vector<1x8x128xi1>
    %485 = arith.extui %484 : vector<1x8x128xi1> to vector<1x8x128xi32>
    %486 = arith.sitofp %485 : vector<1x8x128xi32> to vector<1x8x128xf32>
    %487 = arith.index_cast %c6_i32_268 : i32 to index
    %c0_284 = arith.constant 0 : index
    %c0_285 = arith.constant 0 : index
    %488 = vector.load %arg17[%487, %c0_284, %c0_285] : memref<8x8x128xf32, #tpu.memory_space<vmem>>, vector<1x8x128xf32>
    tpu.vector_store %arg17[%487, %c0_284, %c0_285], %486 {strides = array<i32>} : memref<8x8x128xf32, #tpu.memory_space<vmem>>, vector<1x8x128xf32>,
    %c7_i32_286 = arith.constant 7 : i32
    %c8_i32_287 = arith.constant 8 : i32
    %489 = arith.muli %c7_i32_286, %c8_i32_287 : i32
    %490 = tpu.assume_multiple %489, 8 : i32
    %491 = arith.index_cast %490 : i32 to index
    %c0_288 = arith.constant 0 : index
    %492 = vector.load %arg16[%491, %c0_288] : memref<64x128xf32, #tpu.memory_space<vmem>>, vector<8x128xf32>
    %c0_289 = arith.constant 0 : index
    %c0_290 = arith.constant 0 : index
    %493 = vector.load %arg14[%c0_289, %c0_290] : memref<8x128xf32, #tpu.memory_space<vmem>>, vector<8x128xf32>
    %494 = vector.broadcast %cst_159 : f32 to vector<8x128xf32>
    %495 = arith.subf %493, %494 : vector<8x128xf32>
    %cst_291 = arith.constant 0.000000e+00 : f32
    %496 = vector.broadcast %cst_291 : f32 to vector<8x128xf32>
    %497 = arith.cmpf ogt, %495, %496 : vector<8x128xf32>
    %c0_292 = arith.constant 0 : index
    %c0_293 = arith.constant 0 : index
    %498 = vector.load %arg13[%c0_292, %c0_293] : memref<8x128xf32, #tpu.memory_space<vmem>>, vector<8x128xf32>
    %499 = arith.mulf %8, %498 : vector<8x128xf32>
    %500 = arith.addf %499, %492 : vector<8x128xf32>
    %c0_294 = arith.constant 0 : index
    %c0_295 = arith.constant 0 : index
    %501 = vector.load %arg14[%c0_294, %c0_295] : memref<8x128xf32, #tpu.memory_space<vmem>>, vector<8x128xf32>
    %502 = arith.mulf %8, %501 : vector<8x128xf32>
    %503 = arith.addf %502, %500 : vector<8x128xf32>
    %cst_296 = arith.constant 0.000000e+00 : f32
    %504 = vector.broadcast %cst_159 : f32 to vector<8x128xf32>
    %505 = vector.broadcast %cst_296 : f32 to vector<8x128xf32>
    %506 = arith.select %497, %504, %505 : vector<8x128xi1>, vector<8x128xf32>
    %507 = arith.subf %503, %506 : vector<8x128xf32>
    %c0_297 = arith.constant 0 : index
    %c0_298 = arith.constant 0 : index
    %508 = vector.load %arg13[%c0_297, %c0_298] : memref<8x128xf32, #tpu.memory_space<vmem>>, vector<8x128xf32>
    tpu.vector_store %arg13[%c0_297, %c0_298], %500 {strides = array<i32>} : memref<8x128xf32, #tpu.memory_space<vmem>>, vector<8x128xf32>,
    %c0_299 = arith.constant 0 : index
    %c0_300 = arith.constant 0 : index
    %509 = vector.load %arg14[%c0_299, %c0_300] : memref<8x128xf32, #tpu.memory_space<vmem>>, vector<8x128xf32>
    tpu.vector_store %arg14[%c0_299, %c0_300], %507 {strides = array<i32>} : memref<8x128xf32, #tpu.memory_space<vmem>>, vector<8x128xf32>,
    %510 = vector.broadcast %cst_159 : f32 to vector<8x128xf32>
    %511 = arith.subf %507, %510 : vector<8x128xf32>
    %cst_301 = arith.constant 0.000000e+00 : f32
    %512 = vector.broadcast %cst_301 : f32 to vector<8x128xf32>
    %513 = arith.cmpf ogt, %511, %512 : vector<8x128xf32>
    %514 = vector.shape_cast %513 : vector<8x128xi1> to vector<1x8x128xi1>
    %515 = arith.extui %514 : vector<1x8x128xi1> to vector<1x8x128xi32>
    %516 = arith.sitofp %515 : vector<1x8x128xi32> to vector<1x8x128xf32>
    %517 = arith.index_cast %c7_i32_286 : i32 to index
    %c0_302 = arith.constant 0 : index
    %c0_303 = arith.constant 0 : index
    %518 = vector.load %arg17[%517, %c0_302, %c0_303] : memref<8x8x128xf32, #tpu.memory_space<vmem>>, vector<1x8x128xf32>
    tpu.vector_store %arg17[%517, %c0_302, %c0_303], %516 {strides = array<i32>} : memref<8x8x128xf32, #tpu.memory_space<vmem>>, vector<1x8x128xf32>,
    %c8_i32_304 = arith.constant 8 : i32
    %c0_305 = arith.constant 0 : index
    %c0_306 = arith.constant 0 : index
    %519 = vector.load %arg18[%c0_305, %c0_306] : memref<8x128xf32, #tpu.memory_space<vmem>>, vector<8x128xf32>
    %cst_307 = arith.constant 1.000000e+00 : f32
    %520 = vector.broadcast %cst_307 : f32 to vector<8x128xf32>
    %521 = arith.subf %519, %520 : vector<8x128xf32>
    %cst_308 = arith.constant 0.000000e+00 : f32
    %522 = vector.broadcast %cst_308 : f32 to vector<8x128xf32>
    %523 = arith.cmpf ogt, %521, %522 : vector<8x128xf32>
    %524 = arith.extui %523 : vector<8x128xi1> to vector<8x128xi32>
    %525 = arith.sitofp %524 : vector<8x128xi32> to vector<8x128xf32>
    %526 = arith.truncf %525 : vector<8x128xf32> to vector<8x128xbf16>
    %c0_309 = arith.constant 0 : index
    %c0_310 = arith.constant 0 : index
    %527 = vector.load %arg8[%c0_309, %c0_310] : memref<8x128xbf16, #tpu.memory_space<vmem>>, vector<8x128xbf16>
    tpu.vector_store %arg8[%c0_309, %c0_310], %526 {strides = array<i32>} : memref<8x128xbf16, #tpu.memory_space<vmem>>, vector<8x128xbf16>,
    %cst_311 = arith.constant dense<0.000000e+00> : vector<8xf32>
    %528 = vector.multi_reduction <add>, %519, %cst_311 [1] : vector<8x128xf32> to vector<8xf32>
    %529 = vector.shape_cast %528 : vector<8xf32> to vector<8x1xf32>
    %cst_312 = arith.constant 3.125000e-02 : f32
    %530 = vector.broadcast %cst_312 : f32 to vector<8x1xf32>
    %531 = arith.mulf %529, %530 : vector<8x1xf32>
    %532 = vector.shape_cast %531 : vector<8x1xf32> to vector<8x1xf32>
    %533 = vector.broadcast %532 : vector<8x1xf32> to vector<8x128xf32>
    %c0_313 = arith.constant 0 : index
    %c0_314 = arith.constant 0 : index
    %534 = vector.load %arg9[%c0_313, %c0_314] : memref<8x128xf32, #tpu.memory_space<vmem>>, vector<8x128xf32>
    tpu.vector_store %arg9[%c0_313, %c0_314], %533 {strides = array<i32>} : memref<8x128xf32, #tpu.memory_space<vmem>>, vector<8x128xf32>,
    %c0_315 = arith.constant 0 : index
    %c0_316 = arith.constant 0 : index
    %c0_317 = arith.constant 0 : index
    %535 = vector.load %arg17[%c0_315, %c0_316, %c0_317] : memref<8x8x128xf32, #tpu.memory_space<vmem>>, vector<8x8x128xf32>
    %536 = arith.truncf %535 : vector<8x8x128xf32> to vector<8x8x128xbf16>
    %c0_318 = arith.constant 0 : index
    %c0_319 = arith.constant 0 : index
    %c0_320 = arith.constant 0 : index
    %537 = vector.load %arg10[%c0_318, %c0_319, %c0_320] : memref<8x8x128xbf16, #tpu.memory_space<vmem>>, vector<8x8x128xbf16>
    tpu.vector_store %arg10[%c0_318, %c0_319, %c0_320], %536 {strides = array<i32>} : memref<8x8x128xbf16, #tpu.memory_space<vmem>>, vector<8x8x128xbf16>,
    return
  }
  func.func @transform_0(%arg0: i32) -> (i32, i32) {
    %c0_i32 = arith.constant 0 : i32
    %c0_i32_0 = arith.constant 0 : i32
    return %arg0, %c0_i32 : i32, i32
  }
  func.func @transform_1(%arg0: i32) -> (i32, i32) {
    %c0_i32 = arith.constant 0 : i32
    %c0_i32_0 = arith.constant 0 : i32
    %c0_i32_1 = arith.constant 0 : i32
    return %c0_i32, %c0_i32_0 : i32, i32
  }
  func.func @transform_2(%arg0: i32) -> (i32, i32) {
    %c0_i32 = arith.constant 0 : i32
    %c0_i32_0 = arith.constant 0 : i32
    %c0_i32_1 = arith.constant 0 : i32
    return %c0_i32, %c0_i32_0 : i32, i32
  }
  func.func @transform_3(%arg0: i32) -> (i32, i32) {
    %c0_i32 = arith.constant 0 : i32
    %c0_i32_0 = arith.constant 0 : i32
    %c0_i32_1 = arith.constant 0 : i32
    return %c0_i32, %c0_i32_0 : i32, i32
  }
  func.func @transform_4(%arg0: i32) -> (i32, i32) {
    %c0_i32 = arith.constant 0 : i32
    %c0_i32_0 = arith.constant 0 : i32
    %c0_i32_1 = arith.constant 0 : i32
    return %c0_i32, %c0_i32_0 : i32, i32
  }
  func.func @transform_5(%arg0: i32) -> (i32, i32) {
    %c0_i32 = arith.constant 0 : i32
    %c0_i32_0 = arith.constant 0 : i32
    %c0_i32_1 = arith.constant 0 : i32
    return %c0_i32, %c0_i32_0 : i32, i32
  }
  func.func @transform_6(%arg0: i32) -> (i32, i32) {
    %c0_i32 = arith.constant 0 : i32
    %c0_i32_0 = arith.constant 0 : i32
    %c0_i32_1 = arith.constant 0 : i32
    return %c0_i32, %c0_i32_0 : i32, i32
  }
  func.func @transform_7(%arg0: i32) -> (i32, i32) {
    %c0_i32 = arith.constant 0 : i32
    %c0_i32_0 = arith.constant 0 : i32
    return %arg0, %c0_i32 : i32, i32
  }
  func.func @transform_8(%arg0: i32) -> (i32, i32) {
    %c0_i32 = arith.constant 0 : i32
    %c0_i32_0 = arith.constant 0 : i32
    return %arg0, %c0_i32 : i32, i32
  }
  func.func @transform_9(%arg0: i32) -> (i32, i32, i32) {
    %c0_i32 = arith.constant 0 : i32
    %c0_i32_0 = arith.constant 0 : i32
    %c0_i32_1 = arith.constant 0 : i32
    return %arg0, %c0_i32, %c0_i32_0 : i32, i32, i32
  }
}

</mosaic_0001>

<llo_original>
// kernel: tpu_custom_call.1
$region0: #{tpu_custom_call.1}
  #allocation0 [shape = 'u32[]', space=smem, size = 0x4, offset = 0x4, fixed_abs, tag = 'smem constant byte address 0x4 - core index']
  #allocation1 [shape = 'u32[144,128]{1,0:T(1,128)}', space=vmem, size = 0x12000, scoped, tag = 'internal scratch']
  #allocation2 [shape = 'f32[8,128]{1,0:T(8,128)}', space=vmem, size = 0x1000, scoped, tag = 'scratch operand']
  #allocation3 [shape = 'f32[8,128]{1,0:T(8,128)}', space=vmem, size = 0x1000, scoped, tag = 'scratch operand']
  #allocation4 [shape = 'f32[8,128]{1,0:T(8,128)}', space=vmem, size = 0x1000, scoped, tag = 'scratch operand']
  #allocation5 [shape = 'f32[8,128]{1,0:T(8,128)}', space=vmem, size = 0x1000, scoped, tag = 'scratch operand']
  #allocation6 [shape = 'f32[64,128]{1,0:T(8,128)}', space=vmem, size = 0x8000, scoped, tag = 'scratch operand']
  #allocation7 [shape = 'f32[64,128]{1,0:T(8,128)}', space=vmem, size = 0x8000, scoped, tag = 'scratch operand']
  #allocation8 [shape = 'f32[8,8,128]{2,1,0:T(8,128)}', space=vmem, size = 0x8000, scoped, tag = 'scratch operand']
  #allocation9 [shape = 'f32[8,128]{1,0:T(8,128)}', space=vmem, size = 0x1000, scoped, tag = 'scratch operand']
  %s0 = inlined_call_operand.hbm [shape: f32[64,128], index: 0, kind: input, shape index: {}]
  %s1 = inlined_call_operand.hbm [shape: f32[128,128], index: 1, kind: input, shape index: {}]
  %s2 = inlined_call_operand.vmem [shape: f32[1,128], index: 2, kind: input, shape index: {}]
  %s3 = inlined_call_operand.vmem [shape: f32[1,128], index: 3, kind: input, shape index: {}]
  %s4 = inlined_call_operand.hbm [shape: f32[128,128], index: 4, kind: input, shape index: {}]
  %s5 = inlined_call_operand.vmem [shape: f32[1,128], index: 5, kind: input, shape index: {}]
  %s6 = inlined_call_operand.vmem [shape: f32[1,128], index: 6, kind: input, shape index: {}]
  %s7 = inlined_call_operand.hbm [shape: bf16[8,128], index: 7, kind: output, shape index: {0}]
  %s8 = inlined_call_operand.hbm [shape: f32[8,128], index: 8, kind: output, shape index: {1}]
  %s9 = inlined_call_operand.hbm [shape: bf16[8,8,128], index: 9, kind: output, shape index: {2}]
  %10 = xla_tuple %s7, %s8, %s9
  %s11 = sld [smem:[#allocation0]]
  $region70: #{tpu_custom_call.1} parent=0
    _
  %s13 = ssub.s32 1, %s11
  %s14 = scalar_select 0, %s13, %s11
  $region1: #{tpu_custom_call.1} parent=0
    #allocation10 [shape = 'u8[32768]{0}', space=vmem, size = 0x8000, scoped, tag = 'input window, operand 0, single buffered']
    #allocation11 [shape = 's32[1]{0}', space=sflag, size = 0x4, scoped, tag = 'scoped memory for tpu_custom_call.1']
    #allocation12 [shape = 's32[1]{0}', space=sflag, size = 0x4, scoped, tag = 'scoped memory for tpu_custom_call.1']
    #allocation13 [shape = 'u8[65536]{0}', space=vmem, size = 0x10000, scoped, tag = 'input window, operand 1, single buffered']
    #allocation14 [shape = 's32[1]{0}', space=sflag, size = 0x4, scoped, tag = 'scoped memory for tpu_custom_call.1']
    #allocation15 [shape = 'u8[65536]{0}', space=vmem, size = 0x10000, scoped, tag = 'input window, operand 4, single buffered']
    #allocation16 [shape = 'u8[2048]{0}', space=vmem, size = 0x800, scoped, tag = 'output window, operand 0, single buffered']
    #allocation17 [shape = 'u8[4096]{0}', space=vmem, size = 0x1000, scoped, tag = 'output window, operand 1, single buffered']
    #allocation18 [shape = 's32[1]{0}', space=sflag, size = 0x4, scoped, tag = 'scoped memory for tpu_custom_call.1']
    #allocation19 [shape = 'u8[16384]{0}', space=vmem, size = 0x4000, scoped, tag = 'output window, operand 2, single buffered']
    %15 = vsyncpa [#allocation11], 0
    %16 = vsyncpa [#allocation14], 0
    %17 = vsyncpa [#allocation12], 0
    %18 = vsyncpa [#allocation18], 0
    // Predicated region
    $region2: #{tpu_custom_call.1} parent=1 // pred_check
      _
    $region3: #{tpu_custom_call.1} parent=1 // pred_check_branch
      %20 = sbr.rel (0) target = $region5
    $region4: #{tpu_custom_call.1} parent=1 // pred_region
      %s22 = ssub.s32 1024, 1024
      %23 = vsyncadd [#allocation11], %s22
      %s24 = sshll.u32 [#allocation10], 4
      %s25 = int_to_ptr.vmem [resolvable:$true] %s24
      %30 = dma.hbm_to_vmem [thread:$0]  %s0, 1024, %s25, [#allocation11], 128, 128, 8
    $region5: #{tpu_custom_call.1} parent=1 // pred_fallthru
      _
    // Predicated region
    $region6: #{tpu_custom_call.1} parent=1 // pred_check
      _
    $region7: #{tpu_custom_call.1} parent=1 // pred_check_branch
      %32 = sbr.rel (0) target = $region9
    $region8: #{tpu_custom_call.1} parent=1 // pred_region
      %s34 = ssub.s32 2048, 2048
      %35 = vsyncadd [#allocation14], %s34
      %s36 = sshll.u32 [#allocation13], 4
      %s37 = int_to_ptr.vmem [resolvable:$true] %s36
      %42 = dma.hbm_to_vmem [thread:$0]  %s1, 2048, %s37, [#allocation14], 128, 128, 8
    $region9: #{tpu_custom_call.1} parent=1 // pred_fallthru
      _
    // Predicated region
    $region10: #{tpu_custom_call.1} parent=1 // pred_check
      _
    $region11: #{tpu_custom_call.1} parent=1 // pred_check_branch
      %44 = sbr.rel (0) target = $region13
    $region12: #{tpu_custom_call.1} parent=1 // pred_region
      _
    $region13: #{tpu_custom_call.1} parent=1 // pred_fallthru
      _
    // Predicated region
    $region14: #{tpu_custom_call.1} parent=1 // pred_check
      _
    $region15: #{tpu_custom_call.1} parent=1 // pred_check_branch
      %46 = sbr.rel (0) target = $region17
    $region16: #{tpu_custom_call.1} parent=1 // pred_region
      _
    $region17: #{tpu_custom_call.1} parent=1 // pred_fallthru
      _
    // Predicated region
    $region18: #{tpu_custom_call.1} parent=1 // pred_check
      _
    $region19: #{tpu_custom_call.1} parent=1 // pred_check_branch
      %48 = sbr.rel (0) target = $region21
    $region20: #{tpu_custom_call.1} parent=1 // pred_region
      %s50 = ssub.s32 2048, 2048
      %51 = vsyncadd [#allocation14], %s50
      %s52 = sshll.u32 [#allocation15], 4
      %s53 = int_to_ptr.vmem [resolvable:$true] %s52
      %58 = dma.hbm_to_vmem [thread:$0]  %s4, 2048, %s53, [#allocation14], 128, 128, 8
    $region21: #{tpu_custom_call.1} parent=1 // pred_fallthru
      _
    // Predicated region
    $region22: #{tpu_custom_call.1} parent=1 // pred_check
      _
    $region23: #{tpu_custom_call.1} parent=1 // pred_check_branch
      %60 = sbr.rel (0) target = $region25
    $region24: #{tpu_custom_call.1} parent=1 // pred_region
      _
    $region25: #{tpu_custom_call.1} parent=1 // pred_fallthru
      _
    // Predicated region
    $region26: #{tpu_custom_call.1} parent=1 // pred_check
      _
    $region27: #{tpu_custom_call.1} parent=1 // pred_check_branch
      %62 = sbr.rel (0) target = $region29
    $region28: #{tpu_custom_call.1} parent=1 // pred_region
      _
    $region29: #{tpu_custom_call.1} parent=1 // pred_fallthru
      _
    // Predicated region
    $region30: #{tpu_custom_call.1} parent=1 // pred_check
      _
    $region31: #{tpu_custom_call.1} parent=1 // pred_check_branch
      %64 = sbr.rel (0) target = $region33
    $region32: #{tpu_custom_call.1} parent=1 // pred_region
      %65 = dma.done [#allocation11], 1024
    $region33: #{tpu_custom_call.1} parent=1 // pred_fallthru
      _
    // Predicated region
    $region34: #{tpu_custom_call.1} parent=1 // pred_check
      _
    $region35: #{tpu_custom_call.1} parent=1 // pred_check_branch
      %67 = sbr.rel (0) target = $region37
    $region36: #{tpu_custom_call.1} parent=1 // pred_region
      %68 = dma.done [#allocation14], 2048
    $region37: #{tpu_custom_call.1} parent=1 // pred_fallthru
      _
    // Predicated region
    $region38: #{tpu_custom_call.1} parent=1 // pred_check
      _
    $region39: #{tpu_custom_call.1} parent=1 // pred_check_branch
      %70 = sbr.rel (0) target = $region41
    $region40: #{tpu_custom_call.1} parent=1 // pred_region
      %71 = dma.done [#allocation14], 2048
    $region41: #{tpu_custom_call.1} parent=1 // pred_fallthru
      _
    %p72 = scmp.eq.s32.totalorder 0, 0
    // Predicated region
    $region42: #{tpu_custom_call.1} parent=1 // pred_check
      %p73 = pneg %p72
    $region43: #{tpu_custom_call.1} parent=1 // pred_check_branch
      %75 = sbr.rel (%p73) target = $region45
    $region44: #{tpu_custom_call.1} parent=1 // pred_region
      %76 = vst [vmem:[#allocation2] sm:$0xff] 0.0
      %77 = vst [vmem:[#allocation3] sm:$0xff] 0.0
      %78 = vst [vmem:[#allocation4] sm:$0xff] 0.0
      %79 = vst [vmem:[#allocation5] sm:$0xff] 0.0
    $region45: #{tpu_custom_call.1} parent=1 // pred_fallthru
      _
    %v80 = vld [vmem:[%s3] sm:$0x1]
    %v82 = vlaneseq
    %v83 = vshrl.u32 %v82, 7
    %v84 = vsub.s32 0, %v83
    %v85 = vrot.slane %v80, %v84
    %v87 = vld [vmem:[%s6] sm:$0x1]
    %v89 = vlaneseq
    %v90 = vshrl.u32 %v89, 7
    %v91 = vsub.s32 0, %v90
    %v92 = vrot.slane %v87, %v91
    %v94 = vld [vmem:[#allocation10] sm:$0xff]
    %v95 = vld [vmem:[#allocation10 + $0x8] sm:$0xff]
    %v96 = vld [vmem:[#allocation10 + $0x10] sm:$0xff]
    %v97 = vld [vmem:[#allocation10 + $0x18] sm:$0xff]
    %v98 = vld [vmem:[#allocation10 + $0x20] sm:$0xff]
    %v99 = vld [vmem:[#allocation10 + $0x28] sm:$0xff]
    %v100 = vld [vmem:[#allocation10 + $0x30] sm:$0xff]
    %v101 = vld [vmem:[#allocation10 + $0x38] sm:$0xff]
    %v102 = vld [vmem:[#allocation13] sm:$0xff]
    %v103 = vld [vmem:[#allocation13 + $0x8] sm:$0xff]
    %v104 = vld [vmem:[#allocation13 + $0x10] sm:$0xff]
    %v105 = vld [vmem:[#allocation13 + $0x18] sm:$0xff]
    %v106 = vld [vmem:[#allocation13 + $0x20] sm:$0xff]
    %v107 = vld [vmem:[#allocation13 + $0x28] sm:$0xff]
    %v108 = vld [vmem:[#allocation13 + $0x30] sm:$0xff]
    %v109 = vld [vmem:[#allocation13 + $0x38] sm:$0xff]
    %v110 = vld [vmem:[#allocation13 + $0x40] sm:$0xff]
    %v111 = vld [vmem:[#allocation13 + $0x48] sm:$0xff]
    %v112 = vld [vmem:[#allocation13 + $0x50] sm:$0xff]
    %v113 = vld [vmem:[#allocation13 + $0x58] sm:$0xff]
    %v114 = vld [vmem:[#allocation13 + $0x60] sm:$0xff]
    %v115 = vld [vmem:[#allocation13 + $0x68] sm:$0xff]
    %v116 = vld [vmem:[#allocation13 + $0x70] sm:$0xff]
    %v117 = vld [vmem:[#allocation13 + $0x78] sm:$0xff]
    %v118 = vld [vmem:[%s2] sm:$0x1]
    %v120 = vlaneseq
    %v121 = vshrl.u32 %v120, 7
    %v122 = vsub.s32 0, %v121
    %v123 = vrot.slane %v118, %v122
    %125 = vmatprep.subr.mxu0 0.0
    %126 = vmatpush1.msra.mxu0 %v102
    %127 = vmatprep.subr.mxu0 0.0
    %128 = vmatpush1.msra.mxu0 %v103
    %129 = vmatprep.subr.mxu0 0.0
    %130 = vmatpush1.msra.mxu0 %v104
    %131 = vmatprep.subr.mxu0 0.0
    %132 = vmatpush1.msra.mxu0 %v105
    %133 = vmatprep.subr.mxu0 0.0
    %134 = vmatpush1.msra.mxu0 %v106
    %135 = vmatprep.subr.mxu0 0.0
    %136 = vmatpush1.msra.mxu0 %v107
    %137 = vmatprep.subr.mxu0 0.0
    %138 = vmatpush1.msra.mxu0 %v108
    %139 = vmatprep.subr.mxu0 0.0
    %140 = vmatpush1.msra.mxu0 %v109
    %141 = vmatprep.subr.mxu0 0.0
    %142 = vmatpush1.msra.mxu0 %v110
    %143 = vmatprep.subr.mxu0 0.0
    %144 = vmatpush1.msra.mxu0 %v111
    %145 = vmatprep.subr.mxu0 0.0
    %146 = vmatpush1.msra.mxu0 %v112
    %147 = vmatprep.subr.mxu0 0.0
    %148 = vmatpush1.msra.mxu0 %v113
    %149 = vmatprep.subr.mxu0 0.0
    %150 = vmatpush1.msra.mxu0 %v114
    %151 = vmatprep.subr.mxu0 0.0
    %152 = vmatpush1.msra.mxu0 %v115
    %153 = vmatprep.subr.mxu0 0.0
    %154 = vmatpush1.msra.mxu0 %v116
    %155 = vmatprep.subr.mxu0 0.0
    %156 = vmatpush1.msra.mxu0 %v117
    %157 = vmatprep.subr.mxu0 0.0
    %158 = vmatpush1.msra.mxu0 0.0
    %159 = vmatprep.subr.mxu0 0.0
    %160 = vmatpush1.msra.mxu0 0.0
    %161 = vmatprep.subr.mxu0 0.0
    %162 = vmatpush1.msra.mxu0 0.0
    %163 = vmatprep.subr.mxu0 0.0
    %164 = vmatpush1.msra.mxu0 0.0
    %165 = vmatprep.subr.mxu0 0.0
    %166 = vmatpush1.msra.mxu0 0.0
    %167 = vmatprep.subr.mxu0 0.0
    %168 = vmatpush1.msra.mxu0 0.0
    %169 = vmatprep.subr.mxu0 0.0
    %170 = vmatpush1.msra.mxu0 0.0
    %171 = vmatprep.subr.mxu0 0.0
    %172 = vmatpush1.msra.mxu0 0.0
    %173 = vmatprep.subr.mxu0 0.0
    %174 = vmatpush1.msra.mxu0 0.0
    %175 = vmatprep.subr.mxu0 0.0
    %176 = vmatpush1.msra.mxu0 0.0
    %177 = vmatprep.subr.mxu0 0.0
    %178 = vmatpush1.msra.mxu0 0.0
    %179 = vmatprep.subr.mxu0 0.0
    %180 = vmatpush1.msra.mxu0 0.0
    %181 = vmatprep.subr.mxu0 0.0
    %182 = vmatpush1.msra.mxu0 0.0
    %183 = vmatprep.subr.mxu0 0.0
    %184 = vmatpush1.msra.mxu0 0.0
    %185 = vmatprep.subr.mxu0 0.0
    %186 = vmatpush1.msra.mxu0 0.0
    %187 = vmatprep.subr.mxu0 0.0
    %188 = vmatpush1.msra.mxu0 0.0
    %189 = vmatprep.mubr.f32.mxu0 0.0
    %190 = vmatmul.mubr.f32.gmra.mrb[0].mxu0 %v94
    %v191 = vpop.f32.mrb[0].mxu0
    %v192 = vadd.f32 %v123, %v191
    %v193 = vpop.f32.mrb[0].mxu0
    %194 = vmatprep.mubr.f32.mxu0 0.0
    %195 = vmatmul.mubr.f32.gmra.mrb[0].mxu0 %v95
    %v196 = vpop.f32.mrb[0].mxu0
    %v197 = vadd.f32 %v123, %v196
    %v198 = vpop.f32.mrb[0].mxu0
    %199 = vmatprep.mubr.f32.mxu0 0.0
    %200 = vmatmul.mubr.f32.gmra.mrb[0].mxu0 %v96
    %v201 = vpop.f32.mrb[0].mxu0
    %v202 = vadd.f32 %v123, %v201
    %v203 = vpop.f32.mrb[0].mxu0
    %204 = vmatprep.mubr.f32.mxu0 0.0
    %205 = vmatmul.mubr.f32.gmra.mrb[0].mxu0 %v97
    %v206 = vpop.f32.mrb[0].mxu0
    %v207 = vadd.f32 %v123, %v206
    %v208 = vpop.f32.mrb[0].mxu0
    %209 = vmatprep.mubr.f32.mxu0 0.0
    %210 = vmatmul.mubr.f32.gmra.mrb[0].mxu0 %v98
    %v211 = vpop.f32.mrb[0].mxu0
    %v212 = vadd.f32 %v123, %v211
    %v213 = vpop.f32.mrb[0].mxu0
    %214 = vmatprep.mubr.f32.mxu0 0.0
    %215 = vmatmul.mubr.f32.gmra.mrb[0].mxu0 %v99
    %v216 = vpop.f32.mrb[0].mxu0
    %v217 = vadd.f32 %v123, %v216
    %v218 = vpop.f32.mrb[0].mxu0
    %219 = vmatprep.mubr.f32.mxu0 0.0
    %220 = vmatmul.mubr.f32.gmra.mrb[0].mxu0 %v100
    %v221 = vpop.f32.mrb[0].mxu0
    %v222 = vadd.f32 %v123, %v221
    %v223 = vpop.f32.mrb[0].mxu0
    %224 = vmatprep.mubr.f32.mxu0 0.0
    %225 = vmatmul.mubr.f32.gmra.mrb[0].mxu0 %v101
    %v226 = vpop.f32.mrb[0].mxu0
    %v227 = vadd.f32 %v123, %v226
    %v228 = vpop.f32.mrb[0].mxu0
    %229 = vdwg.mxu0
    %230 = vst [vmem:[#allocation6] sm:$0xff] %v192
    %231 = vst [vmem:[#allocation6 + $0x8] sm:$0xff] %v197
    %232 = vst [vmem:[#allocation6 + $0x10] sm:$0xff] %v202
    %233 = vst [vmem:[#allocation6 + $0x18] sm:$0xff] %v207
    %234 = vst [vmem:[#allocation6 + $0x20] sm:$0xff] %v212
    %235 = vst [vmem:[#allocation6 + $0x28] sm:$0xff] %v217
    %236 = vst [vmem:[#allocation6 + $0x30] sm:$0xff] %v222
    %237 = vst [vmem:[#allocation6 + $0x38] sm:$0xff] %v227
    %v238 = vld [vmem:[#allocation6] sm:$0xff]
    %v239 = vld [vmem:[#allocation3] sm:$0xff]
    %v240 = vsub.f32 %v239, 1.0
    %vm241 = vcmp.gt.f32.partialorder %v240, 0.0
    %v242 = vld [vmem:[#allocation2] sm:$0xff]
    %v243 = vmul.f32 %v85, %v242
    %v244 = vadd.f32 %v243, %v238
    %v245 = vmul.f32 %v85, %v239
    %v246 = vadd.f32 %v245, %v244
    %v247 = vsel %vm241, 1.0, 0.0
    %v248 = vsub.f32 %v246, %v247
    %249 = vst [vmem:[#allocation2] sm:$0xff] %v244
    %250 = vst [vmem:[#allocation3] sm:$0xff] %v248
    %v251 = vsub.f32 %v248, 1.0
    %vm252 = vcmp.gt.f32.partialorder %v251, 0.0
    %v253 = vsel %vm252, 1, 0
    %v254 = vcvt.s32.f32 %v253
    %255 = vst [vmem:[#allocation6] sm:$0xff] %v254
    %256 = vst [vmem:[#allocation9] sm:$0x1] %v248
    %s257 = scalar_lea.vmem [#allocation6], 8
    %v258 = vld [vmem:[%s257] sm:$0xff]
    %v259 = vld [vmem:[#allocation3] sm:$0xff]
    %v260 = vsub.f32 %v259, 1.0
    %vm261 = vcmp.gt.f32.partialorder %v260, 0.0
    %v262 = vld [vmem:[#allocation2] sm:$0xff]
    %v263 = vmul.f32 %v85, %v262
    %v264 = vadd.f32 %v263, %v258
    %v265 = vmul.f32 %v85, %v259
    %v266 = vadd.f32 %v265, %v264
    %v267 = vsel %vm261, 1.0, 0.0
    %v268 = vsub.f32 %v266, %v267
    %269 = vst [vmem:[#allocation2] sm:$0xff] %v264
    %270 = vst [vmem:[#allocation3] sm:$0xff] %v268
    %v271 = vsub.f32 %v268, 1.0
    %vm272 = vcmp.gt.f32.partialorder %v271, 0.0
    %v273 = vsel %vm272, 1, 0
    %v274 = vcvt.s32.f32 %v273
    %275 = vst [vmem:[%s257] sm:$0xff] %v274
    %276 = vst [vmem:[#allocation9 + $0x1] sm:$0x1] %v268
    %s277 = scalar_lea.vmem [#allocation6], 16
    %v278 = vld [vmem:[%s277] sm:$0xff]
    %v279 = vld [vmem:[#allocation3] sm:$0xff]
    %v280 = vsub.f32 %v279, 1.0
    %vm281 = vcmp.gt.f32.partialorder %v280, 0.0
    %v282 = vld [vmem:[#allocation2] sm:$0xff]
    %v283 = vmul.f32 %v85, %v282
    %v284 = vadd.f32 %v283, %v278
    %v285 = vmul.f32 %v85, %v279
    %v286 = vadd.f32 %v285, %v284
    %v287 = vsel %vm281, 1.0, 0.0
    %v288 = vsub.f32 %v286, %v287
    %289 = vst [vmem:[#allocation2] sm:$0xff] %v284
    %290 = vst [vmem:[#allocation3] sm:$0xff] %v288
    %v291 = vsub.f32 %v288, 1.0
    %vm292 = vcmp.gt.f32.partialorder %v291, 0.0
    %v293 = vsel %vm292, 1, 0
    %v294 = vcvt.s32.f32 %v293
    %295 = vst [vmem:[%s277] sm:$0xff] %v294
    %296 = vst [vmem:[#allocation9 + $0x2] sm:$0x1] %v288
    %s297 = scalar_lea.vmem [#allocation6], 24
    %v298 = vld [vmem:[%s297] sm:$0xff]
    %v299 = vld [vmem:[#allocation3] sm:$0xff]
    %v300 = vsub.f32 %v299, 1.0
    %vm301 = vcmp.gt.f32.partialorder %v300, 0.0
    %v302 = vld [vmem:[#allocation2] sm:$0xff]
    %v303 = vmul.f32 %v85, %v302
    %v304 = vadd.f32 %v303, %v298
    %v305 = vmul.f32 %v85, %v299
    %v306 = vadd.f32 %v305, %v304
    %v307 = vsel %vm301, 1.0, 0.0
    %v308 = vsub.f32 %v306, %v307
    %309 = vst [vmem:[#allocation2] sm:$0xff] %v304
    %310 = vst [vmem:[#allocation3] sm:$0xff] %v308
    %v311 = vsub.f32 %v308, 1.0
    %vm312 = vcmp.gt.f32.partialorder %v311, 0.0
    %v313 = vsel %vm312, 1, 0
    %v314 = vcvt.s32.f32 %v313
    %315 = vst [vmem:[%s297] sm:$0xff] %v314
    %316 = vst [vmem:[#allocation9 + $0x3] sm:$0x1] %v308
    %s317 = scalar_lea.vmem [#allocation6], 32
    %v318 = vld [vmem:[%s317] sm:$0xff]
    %v319 = vld [vmem:[#allocation3] sm:$0xff]
    %v320 = vsub.f32 %v319, 1.0
    %vm321 = vcmp.gt.f32.partialorder %v320, 0.0
    %v322 = vld [vmem:[#allocation2] sm:$0xff]
    %v323 = vmul.f32 %v85, %v322
    %v324 = vadd.f32 %v323, %v318
    %v325 = vmul.f32 %v85, %v319
    %v326 = vadd.f32 %v325, %v324
    %v327 = vsel %vm321, 1.0, 0.0
    %v328 = vsub.f32 %v326, %v327
    %329 = vst [vmem:[#allocation2] sm:$0xff] %v324
    %330 = vst [vmem:[#allocation3] sm:$0xff] %v328
    %v331 = vsub.f32 %v328, 1.0
    %vm332 = vcmp.gt.f32.partialorder %v331, 0.0
    %v333 = vsel %vm332, 1, 0
    %v334 = vcvt.s32.f32 %v333
    %335 = vst [vmem:[%s317] sm:$0xff] %v334
    %336 = vst [vmem:[#allocation9 + $0x4] sm:$0x1] %v328
    %s337 = scalar_lea.vmem [#allocation6], 40
    %v338 = vld [vmem:[%s337] sm:$0xff]
    %v339 = vld [vmem:[#allocation3] sm:$0xff]
    %v340 = vsub.f32 %v339, 1.0
    %vm341 = vcmp.gt.f32.partialorder %v340, 0.0
    %v342 = vld [vmem:[#allocation2] sm:$0xff]
    %v343 = vmul.f32 %v85, %v342
    %v344 = vadd.f32 %v343, %v338
    %v345 = vmul.f32 %v85, %v339
    %v346 = vadd.f32 %v345, %v344
    %v347 = vsel %vm341, 1.0, 0.0
    %v348 = vsub.f32 %v346, %v347
    %349 = vst [vmem:[#allocation2] sm:$0xff] %v344
    %350 = vst [vmem:[#allocation3] sm:$0xff] %v348
    %v351 = vsub.f32 %v348, 1.0
    %vm352 = vcmp.gt.f32.partialorder %v351, 0.0
    %v353 = vsel %vm352, 1, 0
    %v354 = vcvt.s32.f32 %v353
    %355 = vst [vmem:[%s337] sm:$0xff] %v354
    %356 = vst [vmem:[#allocation9 + $0x5] sm:$0x1] %v348
    %s357 = scalar_lea.vmem [#allocation6], 48
    %v358 = vld [vmem:[%s357] sm:$0xff]
    %v359 = vld [vmem:[#allocation3] sm:$0xff]
    %v360 = vsub.f32 %v359, 1.0
    %vm361 = vcmp.gt.f32.partialorder %v360, 0.0
    %v362 = vld [vmem:[#allocation2] sm:$0xff]
    %v363 = vmul.f32 %v85, %v362
    %v364 = vadd.f32 %v363, %v358
    %v365 = vmul.f32 %v85, %v359
    %v366 = vadd.f32 %v365, %v364
    %v367 = vsel %vm361, 1.0, 0.0
    %v368 = vsub.f32 %v366, %v367
    %369 = vst [vmem:[#allocation2] sm:$0xff] %v364
    %370 = vst [vmem:[#allocation3] sm:$0xff] %v368
    %v371 = vsub.f32 %v368, 1.0
    %vm372 = vcmp.gt.f32.partialorder %v371, 0.0
    %v373 = vsel %vm372, 1, 0
    %v374 = vcvt.s32.f32 %v373
    %375 = vst [vmem:[%s357] sm:$0xff] %v374
    %376 = vst [vmem:[#allocation9 + $0x6] sm:$0x1] %v368
    %s377 = scalar_lea.vmem [#allocation6], 56
    %v378 = vld [vmem:[%s377] sm:$0xff]
    %v379 = vld [vmem:[#allocation3] sm:$0xff]
    %v380 = vsub.f32 %v379, 1.0
    %vm381 = vcmp.gt.f32.partialorder %v380, 0.0
    %v382 = vld [vmem:[#allocation2] sm:$0xff]
    %v383 = vmul.f32 %v85, %v382
    %v384 = vadd.f32 %v383, %v378
    %v385 = vmul.f32 %v85, %v379
    %v386 = vadd.f32 %v385, %v384
    %v387 = vsel %vm381, 1.0, 0.0
    %v388 = vsub.f32 %v386, %v387
    %389 = vst [vmem:[#allocation2] sm:$0xff] %v384
    %390 = vst [vmem:[#allocation3] sm:$0xff] %v388
    %v391 = vsub.f32 %v388, 1.0
    %vm392 = vcmp.gt.f32.partialorder %v391, 0.0
    %v393 = vsel %vm392, 1, 0
    %v394 = vcvt.s32.f32 %v393
    %395 = vst [vmem:[%s377] sm:$0xff] %v394
    %396 = vst [vmem:[#allocation9 + $0x7] sm:$0x1] %v388
    %v397 = vld [vmem:[#allocation6] sm:$0xff]
    %v398 = vld [vmem:[#allocation6 + $0x8] sm:$0xff]
    %v399 = vld [vmem:[#allocation6 + $0x10] sm:$0xff]
    %v400 = vld [vmem:[#allocation6 + $0x18] sm:$0xff]
    %v401 = vld [vmem:[#allocation6 + $0x20] sm:$0xff]
    %v402 = vld [vmem:[#allocation6 + $0x28] sm:$0xff]
    %v403 = vld [vmem:[#allocation6 + $0x30] sm:$0xff]
    %v404 = vld [vmem:[#allocation6 + $0x38] sm:$0xff]
    %v405 = vld [vmem:[#allocation15] sm:$0xff]
    %v406 = vld [vmem:[#allocation15 + $0x8] sm:$0xff]
    %v407 = vld [vmem:[#allocation15 + $0x10] sm:$0xff]
    %v408 = vld [vmem:[#allocation15 + $0x18] sm:$0xff]
    %v409 = vld [vmem:[#allocation15 + $0x20] sm:$0xff]
    %v410 = vld [vmem:[#allocation15 + $0x28] sm:$0xff]
    %v411 = vld [vmem:[#allocation15 + $0x30] sm:$0xff]
    %v412 = vld [vmem:[#allocation15 + $0x38] sm:$0xff]
    %v413 = vld [vmem:[#allocation15 + $0x40] sm:$0xff]
    %v414 = vld [vmem:[#allocation15 + $0x48] sm:$0xff]
    %v415 = vld [vmem:[#allocation15 + $0x50] sm:$0xff]
    %v416 = vld [vmem:[#allocation15 + $0x58] sm:$0xff]
    %v417 = vld [vmem:[#allocation15 + $0x60] sm:$0xff]
    %v418 = vld [vmem:[#allocation15 + $0x68] sm:$0xff]
    %v419 = vld [vmem:[#allocation15 + $0x70] sm:$0xff]
    %v420 = vld [vmem:[#allocation15 + $0x78] sm:$0xff]
    %v421 = vld [vmem:[%s5] sm:$0x1]
    %v423 = vlaneseq
    %v424 = vshrl.u32 %v423, 7
    %v425 = vsub.s32 0, %v424
    %v426 = vrot.slane %v421, %v425
    %428 = vmatprep.subr.mxu0 0.0
    %429 = vmatpush1.msra.mxu0 %v405
    %430 = vmatprep.subr.mxu0 0.0
    %431 = vmatpush1.msra.mxu0 %v406
    %432 = vmatprep.subr.mxu0 0.0
    %433 = vmatpush1.msra.mxu0 %v407
    %434 = vmatprep.subr.mxu0 0.0
    %435 = vmatpush1.msra.mxu0 %v408
    %436 = vmatprep.subr.mxu0 0.0
    %437 = vmatpush1.msra.mxu0 %v409
    %438 = vmatprep.subr.mxu0 0.0
    %439 = vmatpush1.msra.mxu0 %v410
    %440 = vmatprep.subr.mxu0 0.0
    %441 = vmatpush1.msra.mxu0 %v411
    %442 = vmatprep.subr.mxu0 0.0
    %443 = vmatpush1.msra.mxu0 %v412
    %444 = vmatprep.subr.mxu0 0.0
    %445 = vmatpush1.msra.mxu0 %v413
    %446 = vmatprep.subr.mxu0 0.0
    %447 = vmatpush1.msra.mxu0 %v414
    %448 = vmatprep.subr.mxu0 0.0
    %449 = vmatpush1.msra.mxu0 %v415
    %450 = vmatprep.subr.mxu0 0.0
    %451 = vmatpush1.msra.mxu0 %v416
    %452 = vmatprep.subr.mxu0 0.0
    %453 = vmatpush1.msra.mxu0 %v417
    %454 = vmatprep.subr.mxu0 0.0
    %455 = vmatpush1.msra.mxu0 %v418
    %456 = vmatprep.subr.mxu0 0.0
    %457 = vmatpush1.msra.mxu0 %v419
    %458 = vmatprep.subr.mxu0 0.0
    %459 = vmatpush1.msra.mxu0 %v420
    %460 = vmatprep.subr.mxu0 0.0
    %461 = vmatpush1.msra.mxu0 0.0
    %462 = vmatprep.subr.mxu0 0.0
    %463 = vmatpush1.msra.mxu0 0.0
    %464 = vmatprep.subr.mxu0 0.0
    %465 = vmatpush1.msra.mxu0 0.0
    %466 = vmatprep.subr.mxu0 0.0
    %467 = vmatpush1.msra.mxu0 0.0
    %468 = vmatprep.subr.mxu0 0.0
    %469 = vmatpush1.msra.mxu0 0.0
    %470 = vmatprep.subr.mxu0 0.0
    %471 = vmatpush1.msra.mxu0 0.0
    %472 = vmatprep.subr.mxu0 0.0
    %473 = vmatpush1.msra.mxu0 0.0
    %474 = vmatprep.subr.mxu0 0.0
    %475 = vmatpush1.msra.mxu0 0.0
    %476 = vmatprep.subr.mxu0 0.0
    %477 = vmatpush1.msra.mxu0 0.0
    %478 = vmatprep.subr.mxu0 0.0
    %479 = vmatpush1.msra.mxu0 0.0
    %480 = vmatprep.subr.mxu0 0.0
    %481 = vmatpush1.msra.mxu0 0.0
    %482 = vmatprep.subr.mxu0 0.0
    %483 = vmatpush1.msra.mxu0 0.0
    %484 = vmatprep.subr.mxu0 0.0
    %485 = vmatpush1.msra.mxu0 0.0
    %486 = vmatprep.subr.mxu0 0.0
    %487 = vmatpush1.msra.mxu0 0.0
    %488 = vmatprep.subr.mxu0 0.0
    %489 = vmatpush1.msra.mxu0 0.0
    %490 = vmatprep.subr.mxu0 0.0
    %491 = vmatpush1.msra.mxu0 0.0
    %492 = vmatprep.mubr.f32.mxu0 0.0
    %493 = vmatmul.mubr.f32.gmra.mrb[0].mxu0 %v397
    %v494 = vpop.f32.mrb[0].mxu0
    %v495 = vadd.f32 %v426, %v494
    %v496 = vpop.f32.mrb[0].mxu0
    %497 = vmatprep.mubr.f32.mxu0 0.0
    %498 = vmatmul.mubr.f32.gmra.mrb[0].mxu0 %v398
    %v499 = vpop.f32.mrb[0].mxu0
    %v500 = vadd.f32 %v426, %v499
    %v501 = vpop.f32.mrb[0].mxu0
    %502 = vmatprep.mubr.f32.mxu0 0.0
    %503 = vmatmul.mubr.f32.gmra.mrb[0].mxu0 %v399
    %v504 = vpop.f32.mrb[0].mxu0
    %v505 = vadd.f32 %v426, %v504
    %v506 = vpop.f32.mrb[0].mxu0
    %507 = vmatprep.mubr.f32.mxu0 0.0
    %508 = vmatmul.mubr.f32.gmra.mrb[0].mxu0 %v400
    %v509 = vpop.f32.mrb[0].mxu0
    %v510 = vadd.f32 %v426, %v509
    %v511 = vpop.f32.mrb[0].mxu0
    %512 = vmatprep.mubr.f32.mxu0 0.0
    %513 = vmatmul.mubr.f32.gmra.mrb[0].mxu0 %v401
    %v514 = vpop.f32.mrb[0].mxu0
    %v515 = vadd.f32 %v426, %v514
    %v516 = vpop.f32.mrb[0].mxu0
    %517 = vmatprep.mubr.f32.mxu0 0.0
    %518 = vmatmul.mubr.f32.gmra.mrb[0].mxu0 %v402
    %v519 = vpop.f32.mrb[0].mxu0
    %v520 = vadd.f32 %v426, %v519
    %v521 = vpop.f32.mrb[0].mxu0
    %522 = vmatprep.mubr.f32.mxu0 0.0
    %523 = vmatmul.mubr.f32.gmra.mrb[0].mxu0 %v403
    %v524 = vpop.f32.mrb[0].mxu0
    %v525 = vadd.f32 %v426, %v524
    %v526 = vpop.f32.mrb[0].mxu0
    %527 = vmatprep.mubr.f32.mxu0 0.0
    %528 = vmatmul.mubr.f32.gmra.mrb[0].mxu0 %v404
    %v529 = vpop.f32.mrb[0].mxu0
    %v530 = vadd.f32 %v426, %v529
    %v531 = vpop.f32.mrb[0].mxu0
    %532 = vdwg.mxu0
    %533 = vst [vmem:[#allocation7] sm:$0xff] %v495
    %534 = vst [vmem:[#allocation7 + $0x8] sm:$0xff] %v500
    %535 = vst [vmem:[#allocation7 + $0x10] sm:$0xff] %v505
    %536 = vst [vmem:[#allocation7 + $0x18] sm:$0xff] %v510
    %537 = vst [vmem:[#allocation7 + $0x20] sm:$0xff] %v515
    %538 = vst [vmem:[#allocation7 + $0x28] sm:$0xff] %v520
    %539 = vst [vmem:[#allocation7 + $0x30] sm:$0xff] %v525
    %540 = vst [vmem:[#allocation7 + $0x38] sm:$0xff] %v530
    %v541 = vld [vmem:[#allocation7] sm:$0xff]
    %v542 = vld [vmem:[#allocation5] sm:$0xff]
    %v543 = vsub.f32 %v542, 1.0
    %vm544 = vcmp.gt.f32.partialorder %v543, 0.0
    %v545 = vld [vmem:[#allocation4] sm:$0xff]
    %v546 = vmul.f32 %v92, %v545
    %v547 = vadd.f32 %v546, %v541
    %v548 = vmul.f32 %v92, %v542
    %v549 = vadd.f32 %v548, %v547
    %v550 = vsel %vm544, 1.0, 0.0
    %v551 = vsub.f32 %v549, %v550
    %552 = vst [vmem:[#allocation4] sm:$0xff] %v547
    %553 = vst [vmem:[#allocation5] sm:$0xff] %v551
    %v554 = vsub.f32 %v551, 1.0
    %vm555 = vcmp.gt.f32.partialorder %v554, 0.0
    %v556 = vsel %vm555, 1, 0
    %v557 = vcvt.s32.f32 %v556
    %558 = vst [vmem:[#allocation8] sm:$0xff] %v557
    %s559 = scalar_lea.vmem [#allocation7], 8
    %v560 = vld [vmem:[%s559] sm:$0xff]
    %v561 = vld [vmem:[#allocation5] sm:$0xff]
    %v562 = vsub.f32 %v561, 1.0
    %vm563 = vcmp.gt.f32.partialorder %v562, 0.0
    %v564 = vld [vmem:[#allocation4] sm:$0xff]
    %v565 = vmul.f32 %v92, %v564
    %v566 = vadd.f32 %v565, %v560
    %v567 = vmul.f32 %v92, %v561
    %v568 = vadd.f32 %v567, %v566
    %v569 = vsel %vm563, 1.0, 0.0
    %v570 = vsub.f32 %v568, %v569
    %571 = vst [vmem:[#allocation4] sm:$0xff] %v566
    %572 = vst [vmem:[#allocation5] sm:$0xff] %v570
    %v573 = vsub.f32 %v570, 1.0
    %vm574 = vcmp.gt.f32.partialorder %v573, 0.0
    %v575 = vsel %vm574, 1, 0
    %v576 = vcvt.s32.f32 %v575
    %s577 = scalar_lea.vmem [#allocation8], 8
    %578 = vst [vmem:[%s577] sm:$0xff] %v576
    %s579 = scalar_lea.vmem [#allocation7], 16
    %v580 = vld [vmem:[%s579] sm:$0xff]
    %v581 = vld [vmem:[#allocation5] sm:$0xff]
    %v582 = vsub.f32 %v581, 1.0
    %vm583 = vcmp.gt.f32.partialorder %v582, 0.0
    %v584 = vld [vmem:[#allocation4] sm:$0xff]
    %v585 = vmul.f32 %v92, %v584
    %v586 = vadd.f32 %v585, %v580
    %v587 = vmul.f32 %v92, %v581
    %v588 = vadd.f32 %v587, %v586
    %v589 = vsel %vm583, 1.0, 0.0
    %v590 = vsub.f32 %v588, %v589
    %591 = vst [vmem:[#allocation4] sm:$0xff] %v586
    %592 = vst [vmem:[#allocation5] sm:$0xff] %v590
    %v593 = vsub.f32 %v590, 1.0
    %vm594 = vcmp.gt.f32.partialorder %v593, 0.0
    %v595 = vsel %vm594, 1, 0
    %v596 = vcvt.s32.f32 %v595
    %s597 = scalar_lea.vmem [#allocation8], 16
    %598 = vst [vmem:[%s597] sm:$0xff] %v596
    %s599 = scalar_lea.vmem [#allocation7], 24
    %v600 = vld [vmem:[%s599] sm:$0xff]
    %v601 = vld [vmem:[#allocation5] sm:$0xff]
    %v602 = vsub.f32 %v601, 1.0
    %vm603 = vcmp.gt.f32.partialorder %v602, 0.0
    %v604 = vld [vmem:[#allocation4] sm:$0xff]
    %v605 = vmul.f32 %v92, %v604
    %v606 = vadd.f32 %v605, %v600
    %v607 = vmul.f32 %v92, %v601
    %v608 = vadd.f32 %v607, %v606
    %v609 = vsel %vm603, 1.0, 0.0
    %v610 = vsub.f32 %v608, %v609
    %611 = vst [vmem:[#allocation4] sm:$0xff] %v606
    %612 = vst [vmem:[#allocation5] sm:$0xff] %v610
    %v613 = vsub.f32 %v610, 1.0
    %vm614 = vcmp.gt.f32.partialorder %v613, 0.0
    %v615 = vsel %vm614, 1, 0
    %v616 = vcvt.s32.f32 %v615
    %s617 = scalar_lea.vmem [#allocation8], 24
    %618 = vst [vmem:[%s617] sm:$0xff] %v616
    %s619 = scalar_lea.vmem [#allocation7], 32
    %v620 = vld [vmem:[%s619] sm:$0xff]
    %v621 = vld [vmem:[#allocation5] sm:$0xff]
    %v622 = vsub.f32 %v621, 1.0
    %vm623 = vcmp.gt.f32.partialorder %v622, 0.0
    %v624 = vld [vmem:[#allocation4] sm:$0xff]
    %v625 = vmul.f32 %v92, %v624
    %v626 = vadd.f32 %v625, %v620
    %v627 = vmul.f32 %v92, %v621
    %v628 = vadd.f32 %v627, %v626
    %v629 = vsel %vm623, 1.0, 0.0
    %v630 = vsub.f32 %v628, %v629
    %631 = vst [vmem:[#allocation4] sm:$0xff] %v626
    %632 = vst [vmem:[#allocation5] sm:$0xff] %v630
    %v633 = vsub.f32 %v630, 1.0
    %vm634 = vcmp.gt.f32.partialorder %v633, 0.0
    %v635 = vsel %vm634, 1, 0
    %v636 = vcvt.s32.f32 %v635
    %s637 = scalar_lea.vmem [#allocation8], 32
    %638 = vst [vmem:[%s637] sm:$0xff] %v636
    %s639 = scalar_lea.vmem [#allocation7], 40
    %v640 = vld [vmem:[%s639] sm:$0xff]
    %v641 = vld [vmem:[#allocation5] sm:$0xff]
    %v642 = vsub.f32 %v641, 1.0
    %vm643 = vcmp.gt.f32.partialorder %v642, 0.0
    %v644 = vld [vmem:[#allocation4] sm:$0xff]
    %v645 = vmul.f32 %v92, %v644
    %v646 = vadd.f32 %v645, %v640
    %v647 = vmul.f32 %v92, %v641
    %v648 = vadd.f32 %v647, %v646
    %v649 = vsel %vm643, 1.0, 0.0
    %v650 = vsub.f32 %v648, %v649
    %651 = vst [vmem:[#allocation4] sm:$0xff] %v646
    %652 = vst [vmem:[#allocation5] sm:$0xff] %v650
    %v653 = vsub.f32 %v650, 1.0
    %vm654 = vcmp.gt.f32.partialorder %v653, 0.0
    %v655 = vsel %vm654, 1, 0
    %v656 = vcvt.s32.f32 %v655
    %s657 = scalar_lea.vmem [#allocation8], 40
    %658 = vst [vmem:[%s657] sm:$0xff] %v656
    %s659 = scalar_lea.vmem [#allocation7], 48
    %v660 = vld [vmem:[%s659] sm:$0xff]
    %v661 = vld [vmem:[#allocation5] sm:$0xff]
    %v662 = vsub.f32 %v661, 1.0
    %vm663 = vcmp.gt.f32.partialorder %v662, 0.0
    %v664 = vld [vmem:[#allocation4] sm:$0xff]
    %v665 = vmul.f32 %v92, %v664
    %v666 = vadd.f32 %v665, %v660
    %v667 = vmul.f32 %v92, %v661
    %v668 = vadd.f32 %v667, %v666
    %v669 = vsel %vm663, 1.0, 0.0
    %v670 = vsub.f32 %v668, %v669
    %671 = vst [vmem:[#allocation4] sm:$0xff] %v666
    %672 = vst [vmem:[#allocation5] sm:$0xff] %v670
    %v673 = vsub.f32 %v670, 1.0
    %vm674 = vcmp.gt.f32.partialorder %v673, 0.0
    %v675 = vsel %vm674, 1, 0
    %v676 = vcvt.s32.f32 %v675
    %s677 = scalar_lea.vmem [#allocation8], 48
    %678 = vst [vmem:[%s677] sm:$0xff] %v676
    %s679 = scalar_lea.vmem [#allocation7], 56
    %v680 = vld [vmem:[%s679] sm:$0xff]
    %v681 = vld [vmem:[#allocation5] sm:$0xff]
    %v682 = vsub.f32 %v681, 1.0
    %vm683 = vcmp.gt.f32.partialorder %v682, 0.0
    %v684 = vld [vmem:[#allocation4] sm:$0xff]
    %v685 = vmul.f32 %v92, %v684
    %v686 = vadd.f32 %v685, %v680
    %v687 = vmul.f32 %v92, %v681
    %v688 = vadd.f32 %v687, %v686
    %v689 = vsel %vm683, 1.0, 0.0
    %v690 = vsub.f32 %v688, %v689
    %691 = vst [vmem:[#allocation4] sm:$0xff] %v686
    %692 = vst [vmem:[#allocation5] sm:$0xff] %v690
    %v693 = vsub.f32 %v690, 1.0
    %vm694 = vcmp.gt.f32.partialorder %v693, 0.0
    %v695 = vsel %vm694, 1, 0
    %v696 = vcvt.s32.f32 %v695
    %s697 = scalar_lea.vmem [#allocation8], 56
    %698 = vst [vmem:[%s697] sm:$0xff] %v696
    %v699 = vld [vmem:[#allocation9] sm:$0xff]
    %v700 = vsub.f32 %v699, 1.0
    %vm701 = vcmp.gt.f32.partialorder %v700, 0.0
    %v702 = vsel %vm701, 1, 0
    %v703 = vcvt.s32.f32 %v702
    %v704 = vpack.c.bf16 %v703, %v703
    %705 = vst [vmem:[#allocation16] sm:$0xf] %v704
    %706 = vadd.xlane.f32.xlu0 %v699
    %v707 = vpop.xlane.xlu0 %706
    %v708 = vmul.f32 %v707, 0.03125
    %709 = vst [vmem:[#allocation17] sm:$0xff] %v708
    %v710 = vld [vmem:[#allocation8] sm:$0xff]
    %v711 = vld [vmem:[#allocation8 + $0x8] sm:$0xff]
    %v712 = vld [vmem:[#allocation8 + $0x10] sm:$0xff]
    %v713 = vld [vmem:[#allocation8 + $0x18] sm:$0xff]
    %v714 = vld [vmem:[#allocation8 + $0x20] sm:$0xff]
    %v715 = vld [vmem:[#allocation8 + $0x28] sm:$0xff]
    %v716 = vld [vmem:[#allocation8 + $0x30] sm:$0xff]
    %v717 = vld [vmem:[#allocation8 + $0x38] sm:$0xff]
    %v718 = vpack.c.bf16 %v710, %v710
    %v719 = vpack.c.bf16 %v711, %v711
    %v720 = vpack.c.bf16 %v712, %v712
    %v721 = vpack.c.bf16 %v713, %v713
    %v722 = vpack.c.bf16 %v714, %v714
    %v723 = vpack.c.bf16 %v715, %v715
    %v724 = vpack.c.bf16 %v716, %v716
    %v725 = vpack.c.bf16 %v717, %v717
    %726 = vst [vmem:[#allocation19] sm:$0xf] %v718
    %727 = vst [vmem:[#allocation19 + $0x4] sm:$0xf] %v719
    %728 = vst [vmem:[#allocation19 + $0x8] sm:$0xf] %v720
    %729 = vst [vmem:[#allocation19 + $0xc] sm:$0xf] %v721
    %730 = vst [vmem:[#allocation19 + $0x10] sm:$0xf] %v722
    %731 = vst [vmem:[#allocation19 + $0x14] sm:$0xf] %v723
    %732 = vst [vmem:[#allocation19 + $0x18] sm:$0xf] %v724
    %733 = vst [vmem:[#allocation19 + $0x1c] sm:$0xf] %v725
    // Predicated region
    $region46: #{tpu_custom_call.1} parent=1 // pred_check
      _
    $region47: #{tpu_custom_call.1} parent=1 // pred_check_branch
      %735 = sbr.rel (0) target = $region49
    $region48: #{tpu_custom_call.1} parent=1 // pred_region
      %s737 = ssub.s32 64, 64
      %738 = vsyncadd [#allocation12], %s737
      %s740 = sshll.u32 [#allocation16], 4
      %s741 = int_to_ptr.vmem [resolvable:$true] %s740
      %743 = dma.vmem_to_hbm [thread:$0]  %s741, 64, %s7, [#allocation12]
    $region49: #{tpu_custom_call.1} parent=1 // pred_fallthru
      _
    // Predicated region
    $region50: #{tpu_custom_call.1} parent=1 // pred_check
      _
    $region51: #{tpu_custom_call.1} parent=1 // pred_check_branch
      %745 = sbr.rel (0) target = $region53
    $region52: #{tpu_custom_call.1} parent=1 // pred_region
      %s747 = ssub.s32 128, 128
      %748 = vsyncadd [#allocation18], %s747
      %s750 = sshll.u32 [#allocation17], 4
      %s751 = int_to_ptr.vmem [resolvable:$true] %s750
      %753 = dma.vmem_to_hbm [thread:$0]  %s751, 128, %s8, [#allocation18]
    $region53: #{tpu_custom_call.1} parent=1 // pred_fallthru
      _
    // Predicated region
    $region54: #{tpu_custom_call.1} parent=1 // pred_check
      _
    $region55: #{tpu_custom_call.1} parent=1 // pred_check_branch
      %755 = sbr.rel (0) target = $region57
    $region56: #{tpu_custom_call.1} parent=1 // pred_region
      %s757 = ssub.s32 512, 512
      %758 = vsyncadd [#allocation18], %s757
      %s759 = sshll.u32 [#allocation19], 4
      %s760 = int_to_ptr.vmem [resolvable:$true] %s759
      %765 = dma.vmem_to_hbm [thread:$0]  %s760, 512, %s9, [#allocation18], 64, 64, 4
    $region57: #{tpu_custom_call.1} parent=1 // pred_fallthru
      _
    // Predicated region
    $region58: #{tpu_custom_call.1} parent=1 // pred_check
      _
    $region59: #{tpu_custom_call.1} parent=1 // pred_check_branch
      %767 = sbr.rel (0) target = $region61
    $region60: #{tpu_custom_call.1} parent=1 // pred_region
      %768 = dma.done [#allocation12], 64
    $region61: #{tpu_custom_call.1} parent=1 // pred_fallthru
      _
    // Predicated region
    $region62: #{tpu_custom_call.1} parent=1 // pred_check
      _
    $region63: #{tpu_custom_call.1} parent=1 // pred_check_branch
      %770 = sbr.rel (0) target = $region65
    $region64: #{tpu_custom_call.1} parent=1 // pred_region
      %771 = dma.done [#allocation18], 128
    $region65: #{tpu_custom_call.1} parent=1 // pred_fallthru
      _
    // Predicated region
    $region66: #{tpu_custom_call.1} parent=1 // pred_check
      _
    $region67: #{tpu_custom_call.1} parent=1 // pred_check_branch
      %773 = sbr.rel (0) target = $region69
    $region68: #{tpu_custom_call.1} parent=1 // pred_region
      %774 = dma.done [#allocation18], 512
    $region69: #{tpu_custom_call.1} parent=1 // pred_fallthru
      _
    %775 = vsyncpa [#allocation11], 1
    %776 = vsyncpa [#allocation14], 1
    %777 = vsyncpa [#allocation12], 1
    %778 = vsyncpa [#allocation18], 1

</llo_original>
